<compile_context>
chip_gen: v7x
topology: tpu7x:2x2x1
jax: 0.10.0
libtpu: 0.0.40
codegen_flags: <defaults>
</compile_context>

<pallas_src>
import functools
import math

import jax
import jax.numpy as jnp
from jax.experimental import pallas as pl
from jax.experimental.pallas import tpu as pltpu


def _layernorm(v, w, b, eps=1e-5):
    """One-pass LayerNorm (E[x^2] - E[x]^2): halves cross-lane reduction passes."""
    mu = jnp.mean(v, axis=-1, keepdims=True)
    msq = jnp.mean(v * v, axis=-1, keepdims=True)
    var = msq - mu * mu
    return (v - mu) * jax.lax.rsqrt(var + eps) * w + b


def _spec(shape, index_map, *, single_buffer=False):
    """BlockSpec helper.  single_buffer=True requests pl.Buffered(1) for blocks
    whose index never (or rarely) changes across the grid, saving the second
    VMEM buffer; falls back to the default if the jax version lacks the kwarg."""
    if single_buffer:
        try:
            return pl.BlockSpec(shape, index_map, pipeline_mode=pl.Buffered(1))
        except (TypeError, AttributeError):
            pass
    return pl.BlockSpec(shape, index_map)


def _const_spec(shape):
    zeros = (0,) * len(shape)
    return _spec(shape, lambda *_: zeros, single_buffer=True)


def _vmem_limit_bytes(need_bytes):
    """Generation-aware scoped-VMEM limit.  Always set explicitly (v5e's default
    scoped limit is only 16 MiB), capped at ~85% of the physical per-core VMEM
    (~54 MiB on v7x, ~108 MiB on v5e/v6e)."""
    cap = None
    try:
        cap = getattr(pltpu.get_tpu_info(), "vmem_capacity_bytes", None)
    except Exception:
        cap = None
    if not cap:
        cap = 64 * 1024 * 1024                    # conservative (v7x per-TC)
    limit = max(int(need_bytes * 1.25) + (2 << 20), 16 << 20)
    return min(limit, int(cap * 0.85))


# ---------------------------------------------------------------------------
# Kernel 1: fused K|V projection.  k|v = LN(x) @ (Wk|Wv) + (bk|bv), written
# head-major (B, H, S, dh).  grid = (B, S // TKV).
# ---------------------------------------------------------------------------
def kv_projection_kernel(x_ref, ln_w_ref, ln_b_ref, wkv_ref, bkv_ref,
                         k_ref, v_ref, *, num_heads):
    x = x_ref[0]                                            # (TKV, D) f32
    xn = _layernorm(x, ln_w_ref[0], ln_b_ref[0])            # f32 LN
    kv = jnp.dot(xn.astype(wkv_ref.dtype), wkv_ref[...],    # one (TKV,D)@(D,2D)
                 preferred_element_type=jnp.float32) + bkv_ref[0]
    TKV, D2 = kv.shape
    D = D2 // 2
    H = num_heads
    dh = D // H
    # Head-major relayout happens ONCE here (per KV tile / per batch), not once
    # per query tile inside the attention kernel.
    k = jnp.transpose(kv[:, :D].reshape(TKV, H, dh), (1, 0, 2))   # (H, TKV, dh)
    v = jnp.transpose(kv[:, D:].reshape(TKV, H, dh), (1, 0, 2))
    k_ref[0] = k.astype(k_ref.dtype)
    v_ref[0] = v.astype(v_ref.dtype)


# ---------------------------------------------------------------------------
# Kernel 2: cross-attention (query = LN(x_hyper), head-major K/V precomputed)
# + residual + FFN + residual.  grid = (B, S // TQ).
# ---------------------------------------------------------------------------
def attn_ffn_kernel(xh_ref, x_ref, k_ref, v_ref,
                    lnh_w_ref, lnh_b_ref, wq_ref, bq_ref, wo_ref, bo_ref,
                    ffln_w_ref, ffln_b_ref, w1_ref, b1_ref, w2_ref, b2_ref,
                    out_ref, *, num_heads, approx_recip):
    xh = xh_ref[0]                                          # (TQ, D) f32 (query side)
    x = x_ref[0]                                            # (TQ, D) f32 (residual)
    kh = k_ref[0]                                           # (H, S, dh) head-major
    vh = v_ref[0]                                           # (H, S, dh)

    TQ, D = xh.shape
    H = num_heads
    dh = D // H
    scale = 1.0 / math.sqrt(float(dh))

    # --- AttentionLayer (pre-LN cross attention; dropouts = identity) --------
    xhn = _layernorm(xh, lnh_w_ref[0], lnh_b_ref[0])
    q = jnp.dot(xhn.astype(wq_ref.dtype), wq_ref[...],
                preferred_element_type=jnp.float32) + bq_ref[0]
    q = q * scale                                           # fold 1/sqrt(dh) once
    qh = jnp.transpose(q.reshape(TQ, H, dh), (1, 0, 2)).astype(kh.dtype)  # (H,TQ,dh)

    # head-batched attention, f32 accumulation on the MXU
    logits = jnp.einsum("hqd,hkd->hqk", qh, kh,
                        preferred_element_type=jnp.float32)             # (H,TQ,S)
    m = jnp.max(logits, axis=-1, keepdims=True)
    p = jnp.exp(logits - m)
    denom = jnp.sum(p, axis=-1, keepdims=True)
    p = p * pl.reciprocal(denom, approx=approx_recip)                    # softmax
    ctx = jnp.einsum("hqk,hkd->hqd", p.astype(vh.dtype), vh,
                     preferred_element_type=jnp.float32)                 # (H,TQ,dh)
    ctx = ctx.astype(wo_ref.dtype)

    # Output projection with Wo pre-reshaped to (H, dh, D): per-head MXU dots
    # accumulated in f32 (trace-time unrolled) -> no (H,TQ,dh)->(TQ,D) relayout.
    attn = jnp.dot(ctx[0], wo_ref[0], preferred_element_type=jnp.float32)
    for h in range(1, H):
        attn = attn + jnp.dot(ctx[h], wo_ref[h], preferred_element_type=jnp.float32)
    attn = attn + bo_ref[0]

    x1 = attn + x                                           # Residual(attention)

    # --- FeedForwardLayer -----------------------------------------------------
    x1n = _layernorm(x1, ffln_w_ref[0], ffln_b_ref[0])
    hdn = jnp.dot(x1n.astype(w1_ref.dtype), w1_ref[...],
                  preferred_element_type=jnp.float32) + b1_ref[0]
    hdn = jnp.maximum(hdn, 0.0)                              # ReLU (dropout1 = id)
    ff = jnp.dot(hdn.astype(w2_ref.dtype), w2_ref[...],
                 preferred_element_type=jnp.float32) + b2_ref[0]

    out_ref[0] = (x1 + ff).astype(out_ref.dtype)             # Residual(feedforward)


# ---------------------------------------------------------------------------
# Wrapper
# ---------------------------------------------------------------------------
def transformer_block(x, x_hyper, params, *, num_heads, tq=None, tkv=None,
                      compute_dtype=jnp.bfloat16, approx_recip=True,
                      out_dtype=jnp.float32):
    (ln_w, ln_b, lnh_w, lnh_b, wq, bq, wk, bk, wv, bv, wo, bo,
     ffln_w, ffln_b, w1, b1, w2, b2) = params

    B, S, D = x.shape
    H = num_heads
    D2 = 2 * D
    assert D % H == 0, "d_model must be divisible by num_heads"
    dh = D // H
    # NOTE: for best MXU utilization keep dh a multiple of 128 (lane-dense
    # contractions); smaller dh still runs, just below roofline.

    if tq is None:
        tq = min(S, 128)
    if tkv is None:
        tkv = min(S, 256)
    assert S % tq == 0 and S % tkv == 0, "sequence length must divide tile sizes"

    cd = jnp.dtype(compute_dtype)
    itemsize = cd.itemsize
    if itemsize == 2:   # bf16 sublane packing = 16 rows
        assert (tq % 16 == 0 or tq == S) and (tkv % 16 == 0 or tkv == S), \
            "bf16 tiles must be multiples of 16 rows"
    else:
        assert (tq % 8 == 0 or tq == S) and (tkv % 8 == 0 or tkv == S)

    # Weights cast once in the wrapper; LN params / biases stay f32.
    wq_c = wq.astype(cd)
    wkv_c = jnp.concatenate([wk, wv], axis=1).astype(cd)      # (D, 2D) fused K|V
    bkv = jnp.concatenate([bk, bv], axis=1)                   # (1, 2D)
    wo_h = wo.reshape(H, dh, D).astype(cd)                    # head-major Wo
    w1_c, w2_c = w1.astype(cd), w2.astype(cd)

    # ---------------- kernel 1: fused K/V projection (head-major out) --------
    seq_x = _spec((1, tkv, D), lambda b, t: (b, t, 0))
    kv_out = _spec((1, H, tkv, dh), lambda b, t: (b, 0, t, 0))
    blk1 = (2 * tkv * D * 4                       # x tile (double-buffered)
            + 2 * 2 * tkv * D * itemsize          # k/v out tiles (double-buffered)
            + 2 * D * D * itemsize + 4 * D * 4    # Wkv + bkv + LN params
            + 5 * tkv * D * 4)                    # xn, kv, head-major k/v values
    ce1 = pl.CostEstimate(
        flops=4 * B * S * D * D,
        transcendentals=B * S,
        bytes_accessed=(B * S * D * 4 + 2 * B * S * D * itemsize
                        + 2 * D * D * itemsize + 4 * D * 4))

    k, v = pl.pallas_call(
        functools.partial(kv_projection_kernel, num_heads=H),
        out_shape=(jax.ShapeDtypeStruct((B, H, S, dh), cd),
                   jax.ShapeDtypeStruct((B, H, S, dh), cd)),
        grid=(B, S // tkv),
        in_specs=[seq_x,
                  _const_spec((1, D)), _const_spec((1, D)),     # ln_w, ln_b
                  _const_spec((D, D2)), _const_spec((1, D2))],  # Wkv, bkv
        out_specs=(kv_out, kv_out),
        compiler_params=pltpu.CompilerParams(
            dimension_semantics=("parallel", "parallel"),
            vmem_limit_bytes=_vmem_limit_bytes(blk1)),
        cost_estimate=ce1,
    )(x, ln_w, ln_b, wkv_c, bkv)

    # ---------------- kernel 2: attention + FFN ------------------------------
    seq_q = _spec((1, tq, D), lambda b, t: (b, t, 0))
    # K/V block index only changes with b -> single-buffer to save VMEM.
    full_kv = _spec((1, H, S, dh), lambda b, t: (b, 0, 0, 0), single_buffer=True)

    blk2 = (2 * 2 * tq * D * 4                    # xh, x tiles (double-buffered)
            + 2 * tq * D * 4                      # out tile
            + 2 * 2 * S * D * itemsize            # K, V (counted double-buffered)
            + 6 * D * D * itemsize                # Wq, Wo, W1, W2
            + 2 * H * tq * S * 4                  # logits + p (f32 intermediates)
            + (6 * tq * D + tq * D2) * 4          # q/ctx/x1/x1n/attn/out + hdn
            + (8 * D + 2 * D2) * 4)               # LN params + biases
    ce2 = pl.CostEstimate(
        flops=B * S * (12 * D * D + 4 * S * D),
        transcendentals=B * H * S * S + 3 * B * S,
        bytes_accessed=(3 * B * S * D * 4                 # xh, x read + out write
                        + 2 * B * S * D * itemsize        # K/V fetched once per batch
                        + 6 * D * D * itemsize
                        + (8 * D + 2 * D2) * 4))

    kernel = functools.partial(attn_ffn_kernel, num_heads=H,
                               approx_recip=bool(approx_recip))

    return pl.pallas_call(
        kernel,
        out_shape=jax.ShapeDtypeStruct((B, S, D), out_dtype),
        grid=(B, S // tq),
        in_specs=[seq_q, seq_q, full_kv, full_kv,
                  _const_spec((1, D)), _const_spec((1, D)),     # lnh_w, lnh_b
                  _const_spec((D, D)), _const_spec((1, D)),     # Wq, bq
                  _const_spec((H, dh, D)), _const_spec((1, D)), # Wo (head-major), bo
                  _const_spec((1, D)), _const_spec((1, D)),     # ffln_w, ffln_b
                  _const_spec((D, D2)), _const_spec((1, D2)),   # W1, b1
                  _const_spec((D2, D)), _const_spec((1, D))],   # W2, b2
        out_specs=seq_q,
        compiler_params=pltpu.CompilerParams(
            dimension_semantics=("parallel", "parallel"),
            vmem_limit_bytes=_vmem_limit_bytes(blk2)),
        cost_estimate=ce2,
    )(x_hyper, x, k, v, lnh_w, lnh_b, wq_c, bq, wo_h, bo,
      ffln_w, ffln_b, w1_c, b1, w2_c, b2)


# ---------------------------------------------------------------------------
# Deterministic parameters (matches __init__: trunc-normal std=0.02 Linear
# weights, zero biases, ones/zeros LayerNorm).  Linear weights stored
# pre-transposed as (in_features, out_features).
# ---------------------------------------------------------------------------
def make_params(key, dim):
    def trunc(key, shape, std=0.02):
        return std * jax.random.truncated_normal(key, -2.0, 2.0, shape, jnp.float32)

    ks = jax.random.split(key, 6)
    D, D2 = dim, 2 * dim
    return [
        jnp.ones((1, D), jnp.float32), jnp.zeros((1, D), jnp.float32),   # norm
        jnp.ones((1, D), jnp.float32), jnp.zeros((1, D), jnp.float32),   # norm_hyper
        trunc(ks[0], (D, D)), jnp.zeros((1, D), jnp.float32),            # wq, bq
        trunc(ks[1], (D, D)), jnp.zeros((1, D), jnp.float32),            # wk, bk
        trunc(ks[2], (D, D)), jnp.zeros((1, D), jnp.float32),            # wv, bv
        trunc(ks[3], (D, D)), jnp.zeros((1, D), jnp.float32),            # fc (wo), bo
        jnp.ones((1, D), jnp.float32), jnp.zeros((1, D), jnp.float32),   # ff norm
        trunc(ks[4], (D, D2)), jnp.zeros((1, D2), jnp.float32),          # linear1
        trunc(ks[5], (D2, D)), jnp.zeros((1, D), jnp.float32),           # linear2
    ]


# pure-JAX reference for correctness checking
def reference(x, xh, params, num_heads):
    (ln_w, ln_b, lnh_w, lnh_b, wq, bq, wk, bk, wv, bv, wo, bo,
     ffln_w, ffln_b, w1, b1, w2, b2) = params
    B, S, D = x.shape
    dh = D // num_heads

    def ln(v, w, b):
        mu = v.mean(-1, keepdims=True)
        var = ((v - mu) ** 2).mean(-1, keepdims=True)
        return (v - mu) / jnp.sqrt(var + 1e-5) * w + b

    xn = ln(x, ln_w[0], ln_b[0])
    xhn = ln(xh, lnh_w[0], lnh_b[0])
    q = xhn @ wq + bq[0]
    k = xn @ wk + bk[0]
    v = xn @ wv + bv[0]

    def split(t):
        return t.reshape(B, S, num_heads, dh).transpose(0, 2, 1, 3)

    qh, kh, vh = split(q), split(k), split(v)
    logits = jnp.einsum("bhqd,bhkd->bhqk", qh, kh) / jnp.sqrt(jnp.float32(dh))
    p = jax.nn.softmax(logits, axis=-1)
    o = jnp.einsum("bhqk,bhkd->bhqd", p, vh).transpose(0, 2, 1, 3).reshape(B, S, D)
    attn_out = o @ wo + bo[0]
    x1 = attn_out + x
    x1n = ln(x1, ffln_w[0], ffln_b[0])
    ff = jnp.maximum(x1n @ w1 + b1[0], 0.0) @ w2 + b2[0]
    return x1 + ff


if __name__ == "__main__":
    # dh = D/HEADS = 128 keeps the attention contractions lane-dense (MXU-friendly);
    # S // TQ = 2 exercises the sequence tiling (grid (B, S//TQ) = (2, 2)); tiles
    # are multiples of 16 rows so bf16 blocks hit the (16, 128) min tile exactly.
    B, S, D, HEADS = 2, 32, 256, 2
    TQ = TKV = 16

    key = jax.random.PRNGKey(0)
    kx, khx, kp = jax.random.split(key, 3)
    x = jax.random.normal(kx, (B, S, D), jnp.float32)
    x_hyper = jax.random.normal(khx, (B, S, D), jnp.float32)
    params = make_params(kp, D)

    ref = reference(x, x_hyper, params, HEADS)

    # validation mode: f32 operands, exact softmax reciprocal (tolerance allows
    # for the MXU's f32 pass decomposition)
    out_f32 = transformer_block(x, x_hyper, params, num_heads=HEADS, tq=TQ, tkv=TKV,
                                compute_dtype=jnp.float32, approx_recip=False)
    out_f32 = jax.block_until_ready(out_f32)
    assert out_f32.shape == (B, S, D)
    assert jnp.allclose(out_f32, ref, atol=5e-3, rtol=5e-3), "f32 mismatch vs reference"

    # default fast path: bf16 MXU operands, f32 accumulation, approx EUP reciprocal
    out_fast = transformer_block(x, x_hyper, params, num_heads=HEADS, tq=TQ, tkv=TKV)
    out_fast = jax.block_until_ready(out_fast)
    assert out_fast.shape == (B, S, D)
    assert jnp.allclose(out_fast, ref, atol=3e-2, rtol=3e-2), "bf16 mismatch vs reference"

    print("KERNEL_OK")
</pallas_src>

<mosaic_0001>
module attributes {stable_mosaic.version = 11 : i64} {
  func.func @kv_projection_kernel(%arg0: i32, %arg1: i32, %arg2: memref<1x16x256xf32, #tpu.memory_space<vmem>>, %arg3: memref<1x256xf32, #tpu.memory_space<vmem>>, %arg4: memref<1x256xf32, #tpu.memory_space<vmem>>, %arg5: memref<256x512xf32, #tpu.memory_space<vmem>>, %arg6: memref<1x512xf32, #tpu.memory_space<vmem>>, %arg7: memref<1x2x16x128xf32, #tpu.memory_space<vmem>>, %arg8: memref<1x2x16x128xf32, #tpu.memory_space<vmem>>) attributes {dimension_semantics = [#tpu.dimension_semantics<parallel>, #tpu.dimension_semantics<parallel>], iteration_bounds = array<i64: 2, 2>, scalar_prefetch = 0 : i64, scratch_operands = 0 : i64, tpu.core_type = #tpu.core_type<tc>, window_params = [{transform_indices = @transform_0, window_bounds = array<i64: 1, 16, 256>}, {pipeline_mode = #tpu.pipeline_mode<synchronous>, transform_indices = @transform_1, window_bounds = array<i64: 1, 256>}, {pipeline_mode = #tpu.pipeline_mode<synchronous>, transform_indices = @transform_2, window_bounds = array<i64: 1, 256>}, {pipeline_mode = #tpu.pipeline_mode<synchronous>, transform_indices = @transform_3, window_bounds = array<i64: 256, 512>}, {pipeline_mode = #tpu.pipeline_mode<synchronous>, transform_indices = @transform_4, window_bounds = array<i64: 1, 512>}, {transform_indices = @transform_5, window_bounds = array<i64: 1, 2, 16, 128>}, {transform_indices = @transform_6, window_bounds = array<i64: 1, 2, 16, 128>}]} {
    %c0 = arith.constant 0 : index
    %c0_0 = arith.constant 0 : index
    %c0_1 = arith.constant 0 : index
    %0 = vector.load %arg2[%c0, %c0_0, %c0_1] : memref<1x16x256xf32, #tpu.memory_space<vmem>>, vector<1x16x256xf32>
    %1 = vector.shape_cast %0 : vector<1x16x256xf32> to vector<16x256xf32>
    %c0_2 = arith.constant 0 : index
    %c0_3 = arith.constant 0 : index
    %2 = vector.load %arg3[%c0_2, %c0_3] : memref<1x256xf32, #tpu.memory_space<vmem>>, vector<1x256xf32>
    %3 = vector.shape_cast %2 : vector<1x256xf32> to vector<256xf32>
    %c0_4 = arith.constant 0 : index
    %c0_5 = arith.constant 0 : index
    %4 = vector.load %arg4[%c0_4, %c0_5] : memref<1x256xf32, #tpu.memory_space<vmem>>, vector<1x256xf32>
    %5 = vector.shape_cast %4 : vector<1x256xf32> to vector<256xf32>
    %cst = arith.constant dense<0.000000e+00> : vector<16xf32>
    %6 = vector.multi_reduction <add>, %1, %cst [1] : vector<16x256xf32> to vector<16xf32>
    %7 = vector.shape_cast %6 : vector<16xf32> to vector<16x1xf32>
    %cst_6 = arith.constant 2.560000e+02 : f32
    %8 = vector.broadcast %cst_6 : f32 to vector<16x1xf32>
    %9 = arith.divf %7, %8 : vector<16x1xf32>
    %10 = arith.mulf %1, %1 : vector<16x256xf32>
    %cst_7 = arith.constant dense<0.000000e+00> : vector<16xf32>
    %11 = vector.multi_reduction <add>, %10, %cst_7 [1] : vector<16x256xf32> to vector<16xf32>
    %12 = vector.shape_cast %11 : vector<16xf32> to vector<16x1xf32>
    %cst_8 = arith.constant 2.560000e+02 : f32
    %13 = vector.broadcast %cst_8 : f32 to vector<16x1xf32>
    %14 = arith.divf %12, %13 : vector<16x1xf32>
    %15 = arith.mulf %9, %9 : vector<16x1xf32>
    %16 = arith.subf %14, %15 : vector<16x1xf32>
    %17 = vector.broadcast %9 : vector<16x1xf32> to vector<16x256xf32>
    %18 = arith.subf %1, %17 : vector<16x256xf32>
    %cst_9 = arith.constant 9.99999974E-6 : f32
    %19 = vector.broadcast %cst_9 : f32 to vector<16x1xf32>
    %20 = arith.addf %16, %19 : vector<16x1xf32>
    %21 = math.rsqrt %20 : vector<16x1xf32>
    %22 = vector.broadcast %21 : vector<16x1xf32> to vector<16x256xf32>
    %23 = arith.mulf %18, %22 : vector<16x256xf32>
    %24 = vector.shape_cast %3 : vector<256xf32> to vector<1x256xf32>
    %25 = vector.broadcast %24 : vector<1x256xf32> to vector<16x256xf32>
    %26 = arith.mulf %23, %25 : vector<16x256xf32>
    %27 = vector.shape_cast %5 : vector<256xf32> to vector<1x256xf32>
    %28 = vector.broadcast %27 : vector<1x256xf32> to vector<16x256xf32>
    %29 = arith.addf %26, %28 : vector<16x256xf32>
    %c0_10 = arith.constant 0 : index
    %c0_11 = arith.constant 0 : index
    %30 = vector.load %arg5[%c0_10, %c0_11] : memref<256x512xf32, #tpu.memory_space<vmem>>, vector<256x512xf32>
    %cst_12 = arith.constant dense<0.000000e+00> : vector<16x512xf32>
    %31 = tpu.matmul %29, %30, %cst_12 {dimension_numbers = #tpu.dot_dimension_numbers<[1], [0], [0], [1], [0, 0, 1, 1], [], []>} : vector<16x256xf32>, vector<256x512xf32>, vector<16x512xf32> -> vector<16x512xf32>
    %c0_13 = arith.constant 0 : index
    %c0_14 = arith.constant 0 : index
    %32 = vector.load %arg6[%c0_13, %c0_14] : memref<1x512xf32, #tpu.memory_space<vmem>>, vector<1x512xf32>
    %33 = vector.shape_cast %32 : vector<1x512xf32> to vector<512xf32>
    %34 = vector.shape_cast %33 : vector<512xf32> to vector<1x512xf32>
    %35 = vector.broadcast %34 : vector<1x512xf32> to vector<16x512xf32>
    %36 = arith.addf %31, %35 : vector<16x512xf32>
    %37 = vector.extract_strided_slice %36 {offsets = [0, 0], sizes = [16, 256], strides = [1, 1]} : vector<16x512xf32> to vector<16x256xf32>
    %38 = vector.shape_cast %37 : vector<16x256xf32> to vector<16x2x128xf32>
    %39 = tpu.transpose %38, [1, 0, 2] : vector<16x2x128xf32> -> vector<2x16x128xf32>
    %40 = vector.extract_strided_slice %36 {offsets = [0, 256], sizes = [16, 256], strides = [1, 1]} : vector<16x512xf32> to vector<16x256xf32>
    %41 = vector.shape_cast %40 : vector<16x256xf32> to vector<16x2x128xf32>
    %42 = tpu.transpose %41, [1, 0, 2] : vector<16x2x128xf32> -> vector<2x16x128xf32>
    %c0_15 = arith.constant 0 : index
    %c0_16 = arith.constant 0 : index
    %c0_17 = arith.constant 0 : index
    %c0_18 = arith.constant 0 : index
    %43 = vector.load %arg7[%c0_15, %c0_16, %c0_17, %c0_18] : memref<1x2x16x128xf32, #tpu.memory_space<vmem>>, vector<1x2x16x128xf32>
    %44 = vector.shape_cast %43 : vector<1x2x16x128xf32> to vector<2x16x128xf32>
    %45 = vector.shape_cast %39 : vector<2x16x128xf32> to vector<1x2x16x128xf32>
    tpu.vector_store %arg7[%c0_15, %c0_16, %c0_17, %c0_18], %45 {strides = array<i32>} : memref<1x2x16x128xf32, #tpu.memory_space<vmem>>, vector<1x2x16x128xf32>,
    %c0_19 = arith.constant 0 : index
    %c0_20 = arith.constant 0 : index
    %c0_21 = arith.constant 0 : index
    %c0_22 = arith.constant 0 : index
    %46 = vector.load %arg8[%c0_19, %c0_20, %c0_21, %c0_22] : memref<1x2x16x128xf32, #tpu.memory_space<vmem>>, vector<1x2x16x128xf32>
    %47 = vector.shape_cast %46 : vector<1x2x16x128xf32> to vector<2x16x128xf32>
    %48 = vector.shape_cast %42 : vector<2x16x128xf32> to vector<1x2x16x128xf32>
    tpu.vector_store %arg8[%c0_19, %c0_20, %c0_21, %c0_22], %48 {strides = array<i32>} : memref<1x2x16x128xf32, #tpu.memory_space<vmem>>, vector<1x2x16x128xf32>,
    return
  }
  func.func @transform_0(%arg0: i32, %arg1: i32) -> (i32, i32, i32) {
    %c0_i32 = arith.constant 0 : i32
    %c0_i32_0 = arith.constant 0 : i32
    return %arg0, %arg1, %c0_i32 : i32, i32, i32
  }
  func.func @transform_1(%arg0: i32, %arg1: i32) -> (i32, i32) {
    %c0_i32 = arith.constant 0 : i32
    %c0_i32_0 = arith.constant 0 : i32
    %c0_i32_1 = arith.constant 0 : i32
    return %c0_i32, %c0_i32_0 : i32, i32
  }
  func.func @transform_2(%arg0: i32, %arg1: i32) -> (i32, i32) {
    %c0_i32 = arith.constant 0 : i32
    %c0_i32_0 = arith.constant 0 : i32
    %c0_i32_1 = arith.constant 0 : i32
    return %c0_i32, %c0_i32_0 : i32, i32
  }
  func.func @transform_3(%arg0: i32, %arg1: i32) -> (i32, i32) {
    %c0_i32 = arith.constant 0 : i32
    %c0_i32_0 = arith.constant 0 : i32
    %c0_i32_1 = arith.constant 0 : i32
    return %c0_i32, %c0_i32_0 : i32, i32
  }
  func.func @transform_4(%arg0: i32, %arg1: i32) -> (i32, i32) {
    %c0_i32 = arith.constant 0 : i32
    %c0_i32_0 = arith.constant 0 : i32
    %c0_i32_1 = arith.constant 0 : i32
    return %c0_i32, %c0_i32_0 : i32, i32
  }
  func.func @transform_5(%arg0: i32, %arg1: i32) -> (i32, i32, i32, i32) {
    %c0_i32 = arith.constant 0 : i32
    %c0_i32_0 = arith.constant 0 : i32
    %c0_i32_1 = arith.constant 0 : i32
    return %arg0, %c0_i32, %arg1, %c0_i32_0 : i32, i32, i32, i32
  }
  func.func @transform_6(%arg0: i32, %arg1: i32) -> (i32, i32, i32, i32) {
    %c0_i32 = arith.constant 0 : i32
    %c0_i32_0 = arith.constant 0 : i32
    %c0_i32_1 = arith.constant 0 : i32
    return %arg0, %c0_i32, %arg1, %c0_i32_0 : i32, i32, i32, i32
  }
}

</mosaic_0001>

<llo_original>
// kernel: tpu_custom_call.1
$region0: #{tpu_custom_call.1}
  #allocation0 [shape = 'u32[]', space=smem, size = 0x4, offset = 0x4, fixed_abs, tag = 'smem constant byte address 0x4 - core index']
  #allocation1 [shape = 'u32[144,128]{1,0:T(1,128)}', space=vmem, size = 0x12000, scoped, tag = 'internal scratch']
  #allocation11 [shape = 's32[]', space=sflag, size = 0x4, offset = 0, fixed_abs, tag = 'sflag constant byte address 0x0 - dummy sync flag']
  #allocation13 [shape = 's32[]', space=sflag, size = 0x4, offset = 0, fixed_abs, tag = 'sflag constant byte address 0x0 - dummy sync flag']
  %s0 = inlined_call_operand.hbm [shape: f32[2,32,256], index: 0, kind: input, shape index: {}]
  %s1 = inlined_call_operand.vmem [shape: f32[1,256], index: 1, kind: input, shape index: {}]
  %s2 = inlined_call_operand.hbm [shape: f32[1,256], index: 2, kind: input, shape index: {}]
  %s3 = inlined_call_operand.hbm [shape: f32[256,512], index: 3, kind: input, shape index: {}]
  %s4 = inlined_call_operand.vmem [shape: f32[1,512], index: 4, kind: input, shape index: {}]
  %s5 = inlined_call_operand.hbm [shape: f32[2,2,32,128], index: 5, kind: output, shape index: {0}]
  %s6 = inlined_call_operand.hbm [shape: f32[2,2,32,128], index: 6, kind: output, shape index: {1}]
  %7 = xla_tuple %s5, %s6
  %s8 = sld [smem:[#allocation0]]
  $region73: #{tpu_custom_call.1} parent=0
    _
  %s10 = ssub.s32 1, %s8
  %s11 = scalar_select 0, %s10, %s8
  $region1: #{tpu_custom_call.1} parent=0
    #allocation2 [shape = 'u8[32768]{0}', space=vmem, size = 0x8000, scoped, tag = 'input window, operand 0']
    #allocation3 [shape = 's32[2]{0}', space=sflag, size = 0x8, scoped, tag = 'scoped memory for tpu_custom_call.1']
    #allocation4 [shape = 's32[2]{0}', space=sflag, size = 0x8, scoped, tag = 'scoped memory for tpu_custom_call.1']
    #allocation5 [shape = 'u8[1024]{0}', space=vmem, size = 0x400, scoped, tag = 'input window, operand 2, single buffered']
    #allocation6 [shape = 's32[1]{0}', space=sflag, size = 0x4, scoped, tag = 'scoped memory for tpu_custom_call.1']
    #allocation7 [shape = 'u8[524288]{0}', space=vmem, size = 0x80000, scoped, tag = 'input window, operand 3, single buffered']
    #allocation8 [shape = 'u8[32768]{0}', space=vmem, size = 0x8000, scoped, tag = 'output window, operand 0']
    #allocation9 [shape = 'u8[32768]{0}', space=vmem, size = 0x8000, scoped, tag = 'output window, operand 1']
    #allocation10 [shape = 's32[2]{0}', space=sflag, size = 0x8, scoped, tag = 'scoped memory for tpu_custom_call.1']
    %12 = vsyncpa [#allocation3], 0
    %s13 = scalar_lea.sflag [#allocation3], 1
    %14 = vsyncpa %s13, 0
    %15 = vsyncpa [#allocation6], 0
    %16 = vsyncpa [#allocation4], 0
    %s17 = scalar_lea.sflag [#allocation4], 1
    %18 = vsyncpa %s17, 0
    %19 = vsyncpa [#allocation10], 0
    %s20 = scalar_lea.sflag [#allocation10], 1
    %21 = vsyncpa %s20, 0
    loop: start=0, step=1, limit=6
    $region2: #{tpu_custom_call.1} parent=1 // loop_pre_header
      _
    $region3: #{tpu_custom_call.1} parent=1 // loop_header
      %s23 = sphi 0, %s27
      %p24 = scmp.ge.s32.totalorder %s23, 6
      %s30 = sphi 0, %s42
      %s31 = sphi 0, %s38
      %s32 = sphi 0, %s30
      %s33 = sphi 0, %s31
      %s34 = sphi 0, %s32
      %s35 = sphi 0, %s33
      %s47 = sphi 0, %s49
      %s50 = sphi 0, %s47
      %s51 = sphi 0, %s50
      %s67 = sphi 0, %s51
      %s71 = sphi 0, %s71
      %s73 = sphi 0, %s71
      %s74 = sphi 0, %s73
      %s88 = sphi 0, %s74
      %s92 = sphi 0, %s92
      %s94 = sphi 0, %s92
      %s95 = sphi 0, %s94
      %s109 = sphi 0, %s95
      %s113 = sphi 0, %s113
      %s115 = sphi 0, %s113
      %s116 = sphi 0, %s115
      %s130 = sphi 0, %s116
      %s134 = sphi 0, %s134
      %s136 = sphi 0, %s134
      %s137 = sphi 0, %s136
      %s151 = sphi 0, %s137
      %s159 = sphi 0, %s161
      %s162 = sphi 0, %s159
      %s163 = sphi 0, %s162
      %s179 = sphi 0, %s163
      %s187 = sphi 0, %s189
      %s190 = sphi 0, %s187
      %s191 = sphi 0, %s190
      %s207 = sphi 0, %s191
    $region4: #{tpu_custom_call.1} parent=1 // loop_header_branch
      %26 = sbr.rel (%p24) target = $region8
    $region5: #{tpu_custom_call.1} parent=1 // loop_body
      %s28 = ssub.s32 %s23, 1
      %s29 = ssub.s32 %s23, 2
      %s36 = sadd.s32 1, %s31
      %p37 = scmp.ge.s32.totalorder %s36, 2
      %s38 = scalar_select %p37, 0, %s36
      %s39 = sadd.s32 1, %s30
      %s40 = scalar_select %p37, %s39, %s30
      %p41 = scmp.ge.s32.totalorder %s40, 2
      %s42 = scalar_select %p41, 0, %s40
      %s43 = ssub.s32 %s30, %s42
      %s44 = ssub.s32 %s31, %s38
      %s45 = sor.u32 %s43, %s44
      %p46 = scmp.eq.s32.totalorder %s45, 0
      %s48 = sadd.s32 %s47, 1
      %s49 = scalar_select %p46, %s47, %s48
      %p52 = pneg %p46
      %p53 = scmp.eq.s32.totalorder %s23, 3
      %p54 = por %p52, %p53
      %p55 = scmp.ne.s32.totalorder %s47, %s50
      %p56 = scmp.eq.s32.totalorder %s23, 0
      %p57 = por %p55, %p56
      %p58 = scmp.ne.s32.totalorder %s47, %s50
      %p59 = scmp.eq.s32.totalorder %s28, 3
      %p60 = por %p58, %p59
      %p61 = scmp.ne.s32.totalorder %s50, %s51
      %p62 = scmp.eq.s32.totalorder %s28, 0
      %p63 = por %p61, %p62
      %p64 = scmp.ne.s32.totalorder %s50, %s51
      %p65 = scmp.eq.s32.totalorder %s29, 3
      %p66 = por %p64, %p65
      %p68 = scmp.ne.s32.totalorder %s51, %s67
      %p69 = scmp.eq.s32.totalorder %s29, 0
      %p70 = por %p68, %p69
      %s72 = sadd.s32 %s71, 1
      %p75 = scmp.eq.s32.totalorder %s23, 3
      %p76 = scmp.ne.s32.totalorder %s71, %s73
      %p77 = scmp.eq.s32.totalorder %s23, 0
      %p78 = por %p76, %p77
      %p79 = scmp.ne.s32.totalorder %s71, %s73
      %p80 = scmp.eq.s32.totalorder %s28, 3
      %p81 = por %p79, %p80
      %p82 = scmp.ne.s32.totalorder %s73, %s74
      %p83 = scmp.eq.s32.totalorder %s28, 0
      %p84 = por %p82, %p83
      %p85 = scmp.ne.s32.totalorder %s73, %s74
      %p86 = scmp.eq.s32.totalorder %s29, 3
      %p87 = por %p85, %p86
      %p89 = scmp.ne.s32.totalorder %s74, %s88
      %p90 = scmp.eq.s32.totalorder %s29, 0
      %p91 = por %p89, %p90
      %s93 = sadd.s32 %s92, 1
      %p96 = scmp.eq.s32.totalorder %s23, 3
      %p97 = scmp.ne.s32.totalorder %s92, %s94
      %p98 = scmp.eq.s32.totalorder %s23, 0
      %p99 = por %p97, %p98
      %p100 = scmp.ne.s32.totalorder %s92, %s94
      %p101 = scmp.eq.s32.totalorder %s28, 3
      %p102 = por %p100, %p101
      %p103 = scmp.ne.s32.totalorder %s94, %s95
      %p104 = scmp.eq.s32.totalorder %s28, 0
      %p105 = por %p103, %p104
      %p106 = scmp.ne.s32.totalorder %s94, %s95
      %p107 = scmp.eq.s32.totalorder %s29, 3
      %p108 = por %p106, %p107
      %p110 = scmp.ne.s32.totalorder %s95, %s109
      %p111 = scmp.eq.s32.totalorder %s29, 0
      %p112 = por %p110, %p111
      %s114 = sadd.s32 %s113, 1
      %p117 = scmp.eq.s32.totalorder %s23, 3
      %p118 = scmp.ne.s32.totalorder %s113, %s115
      %p119 = scmp.eq.s32.totalorder %s23, 0
      %p120 = por %p118, %p119
      %p121 = scmp.ne.s32.totalorder %s113, %s115
      %p122 = scmp.eq.s32.totalorder %s28, 3
      %p123 = por %p121, %p122
      %p124 = scmp.ne.s32.totalorder %s115, %s116
      %p125 = scmp.eq.s32.totalorder %s28, 0
      %p126 = por %p124, %p125
      %p127 = scmp.ne.s32.totalorder %s115, %s116
      %p128 = scmp.eq.s32.totalorder %s29, 3
      %p129 = por %p127, %p128
      %p131 = scmp.ne.s32.totalorder %s116, %s130
      %p132 = scmp.eq.s32.totalorder %s29, 0
      %p133 = por %p131, %p132
      %s135 = sadd.s32 %s134, 1
      %p138 = scmp.eq.s32.totalorder %s23, 3
      %p139 = scmp.ne.s32.totalorder %s134, %s136
      %p140 = scmp.eq.s32.totalorder %s23, 0
      %p141 = por %p139, %p140
      %p142 = scmp.ne.s32.totalorder %s134, %s136
      %p143 = scmp.eq.s32.totalorder %s28, 3
      %p144 = por %p142, %p143
      %p145 = scmp.ne.s32.totalorder %s136, %s137
      %p146 = scmp.eq.s32.totalorder %s28, 0
      %p147 = por %p145, %p146
      %p148 = scmp.ne.s32.totalorder %s136, %s137
      %p149 = scmp.eq.s32.totalorder %s29, 3
      %p150 = por %p148, %p149
      %p152 = scmp.ne.s32.totalorder %s137, %s151
      %p153 = scmp.eq.s32.totalorder %s29, 0
      %p154 = por %p152, %p153
      %s155 = ssub.s32 %s30, %s42
      %s156 = ssub.s32 %s31, %s38
      %s157 = sor.u32 %s155, %s156
      %p158 = scmp.eq.s32.totalorder %s157, 0
      %s160 = sadd.s32 %s159, 1
      %s161 = scalar_select %p158, %s159, %s160
      %p164 = pneg %p158
      %p165 = scmp.eq.s32.totalorder %s23, 3
      %p166 = por %p164, %p165
      %p167 = scmp.ne.s32.totalorder %s159, %s162
      %p168 = scmp.eq.s32.totalorder %s23, 0
      %p169 = por %p167, %p168
      %p170 = scmp.ne.s32.totalorder %s159, %s162
      %p171 = scmp.eq.s32.totalorder %s28, 3
      %p172 = por %p170, %p171
      %p173 = scmp.ne.s32.totalorder %s162, %s163
      %p174 = scmp.eq.s32.totalorder %s28, 0
      %p175 = por %p173, %p174
      %p176 = scmp.ne.s32.totalorder %s162, %s163
      %p177 = scmp.eq.s32.totalorder %s29, 3
      %p178 = por %p176, %p177
      %p180 = scmp.ne.s32.totalorder %s163, %s179
      %p181 = scmp.eq.s32.totalorder %s29, 0
      %p182 = por %p180, %p181
      %s183 = ssub.s32 %s30, %s42
      %s184 = ssub.s32 %s31, %s38
      %s185 = sor.u32 %s183, %s184
      %p186 = scmp.eq.s32.totalorder %s185, 0
      %s188 = sadd.s32 %s187, 1
      %s189 = scalar_select %p186, %s187, %s188
      %p192 = pneg %p186
      %p193 = scmp.eq.s32.totalorder %s23, 3
      %p194 = por %p192, %p193
      %p195 = scmp.ne.s32.totalorder %s187, %s190
      %p196 = scmp.eq.s32.totalorder %s23, 0
      %p197 = por %p195, %p196
      %p198 = scmp.ne.s32.totalorder %s187, %s190
      %p199 = scmp.eq.s32.totalorder %s28, 3
      %p200 = por %p198, %p199
      %p201 = scmp.ne.s32.totalorder %s190, %s191
      %p202 = scmp.eq.s32.totalorder %s28, 0
      %p203 = por %p201, %p202
      %p204 = scmp.ne.s32.totalorder %s190, %s191
      %p205 = scmp.eq.s32.totalorder %s29, 3
      %p206 = por %p204, %p205
      %p208 = scmp.ne.s32.totalorder %s191, %s207
      %p209 = scmp.eq.s32.totalorder %s29, 0
      %p210 = por %p208, %p209
      %p211 = scmp.le.s32.totalorder 1, %s23
      %p212 = scmp.lt.s32.totalorder %s23, 5
      %p213 = pnand %p211, %p212
      %p214 = pneg %p213
      // Predicated region
      $region9: #{tpu_custom_call.1} parent=5 // pred_check
        _
      $region10: #{tpu_custom_call.1} parent=5 // pred_check_branch
        %216 = sbr.rel (%p213) target = $region12
      $region11: #{tpu_custom_call.1} parent=5 // pred_region
        %s217 = ssub.s32 %s23, 1
        // Predicated region
        $region13: #{tpu_custom_call.1} parent=11 // pred_check
          %p218 = pneg %p84
        $region14: #{tpu_custom_call.1} parent=11 // pred_check_branch
          %220 = sbr.rel (%p218) target = $region16
        $region15: #{tpu_custom_call.1} parent=11 // pred_region
          _
        $region16: #{tpu_custom_call.1} parent=11 // pred_fallthru
          _
        // Predicated region
        $region17: #{tpu_custom_call.1} parent=11 // pred_check
          %p221 = pneg %p105
        $region18: #{tpu_custom_call.1} parent=11 // pred_check_branch
          %223 = sbr.rel (%p221) target = $region20
        $region19: #{tpu_custom_call.1} parent=11 // pred_region
          %s225 = ssub.s32 32, 32
          %226 = vsyncadd [#allocation6], %s225
          %s228 = sshll.u32 [#allocation5], 4
          %s229 = int_to_ptr.vmem [resolvable:$true] %s228
          %231 = dma.hbm_to_vmem [thread:$0]  %s2, 32, %s229, [#allocation6]
        $region20: #{tpu_custom_call.1} parent=11 // pred_fallthru
          _
        // Predicated region
        $region21: #{tpu_custom_call.1} parent=11 // pred_check
          %p232 = pneg %p126
        $region22: #{tpu_custom_call.1} parent=11 // pred_check_branch
          %234 = sbr.rel (%p232) target = $region24
        $region23: #{tpu_custom_call.1} parent=11 // pred_region
          %s236 = ssub.s32 16384, 16384
          %237 = vsyncadd [#allocation6], %s236
          %s238 = sshll.u32 [#allocation7], 4
          %s239 = int_to_ptr.vmem [resolvable:$true] %s238
          %244 = dma.hbm_to_vmem [thread:$0]  %s3, 16384, %s239, [#allocation6], 512, 512, 32
        $region24: #{tpu_custom_call.1} parent=11 // pred_fallthru
          _
        // Predicated region
        $region25: #{tpu_custom_call.1} parent=11 // pred_check
          %p245 = pneg %p147
        $region26: #{tpu_custom_call.1} parent=11 // pred_check_branch
          %247 = sbr.rel (%p245) target = $region28
        $region27: #{tpu_custom_call.1} parent=11 // pred_region
          _
        $region28: #{tpu_custom_call.1} parent=11 // pred_fallthru
          _
      $region12: #{tpu_custom_call.1} parent=5 // pred_fallthru
        _
      %p248 = scmp.lt.s32.totalorder %s23, 4
      // Predicated region
      $region29: #{tpu_custom_call.1} parent=5 // pred_check
        %p249 = pneg %p248
      $region30: #{tpu_custom_call.1} parent=5 // pred_check_branch
        %251 = sbr.rel (%p249) target = $region32
      $region31: #{tpu_custom_call.1} parent=5 // pred_region
        // Predicated region
        $region33: #{tpu_custom_call.1} parent=31 // pred_check
          %p252 = pneg %p57
        $region34: #{tpu_custom_call.1} parent=31 // pred_check_branch
          %254 = sbr.rel (%p252) target = $region36
        $region35: #{tpu_custom_call.1} parent=31 // pred_region
          %s255 = sand.u32 %s47, 1
          %s256 = scalar_lea.sflag [#allocation3], %s255
          %s257 = sand.u32 %s47, 1
          %s258 = smul.addr %s257, 32
          %s259 = scalar_lea.vmem [#allocation2], %s258
          %s260 = smul.u32 2, %s31
          %s262 = ssub.s32 512, 512
          %263 = vsyncadd %s256, %s262
          %s264 = smul.addr %s260, 2
          %s265 = smul.addr %s30, 8
          %s266 = sadd.s32 %s264, %s265
          %s267 = smul.addr %s266, 128
          %s268 = scalar_lea.hbm %s0, %s267
          %s269 = sshll.u32 %s259, 4
          %s270 = int_to_ptr.vmem [resolvable:$true] %s269
          %275 = dma.hbm_to_vmem [thread:$0]  %s268, 512, %s270, %s256, 256, 256, 16
        $region36: #{tpu_custom_call.1} parent=31 // pred_fallthru
          _
      $region32: #{tpu_custom_call.1} parent=5 // pred_fallthru
        _
      %p276 = scmp.le.s32.totalorder 1, %s23
      %p277 = scmp.lt.s32.totalorder %s23, 5
      %p278 = pnand %p276, %p277
      %p279 = pneg %p278
      // Predicated region
      $region37: #{tpu_custom_call.1} parent=5 // pred_check
        _
      $region38: #{tpu_custom_call.1} parent=5 // pred_check_branch
        %281 = sbr.rel (%p278) target = $region40
      $region39: #{tpu_custom_call.1} parent=5 // pred_region
        %s282 = ssub.s32 %s23, 1
        %s283 = sand.u32 %s50, 1
        %s284 = scalar_lea.sflag [#allocation3], %s283
        %s285 = sand.u32 %s50, 1
        %s286 = smul.addr %s285, 32
        %s287 = scalar_lea.vmem [#allocation2], %s286
        // Predicated region
        $region41: #{tpu_custom_call.1} parent=39 // pred_check
          %p288 = pneg %p63
        $region42: #{tpu_custom_call.1} parent=39 // pred_check_branch
          %290 = sbr.rel (%p288) target = $region44
        $region43: #{tpu_custom_call.1} parent=39 // pred_region
          %291 = dma.done %s284, 512
        $region44: #{tpu_custom_call.1} parent=39 // pred_fallthru
          _
        // Predicated region
        $region45: #{tpu_custom_call.1} parent=39 // pred_check
          %p292 = pneg %p105
        $region46: #{tpu_custom_call.1} parent=39 // pred_check_branch
          %294 = sbr.rel (%p292) target = $region48
        $region47: #{tpu_custom_call.1} parent=39 // pred_region
          %295 = dma.done [#allocation6], 32
        $region48: #{tpu_custom_call.1} parent=39 // pred_fallthru
          _
        // Predicated region
        $region49: #{tpu_custom_call.1} parent=39 // pred_check
          %p296 = pneg %p126
        $region50: #{tpu_custom_call.1} parent=39 // pred_check_branch
          %298 = sbr.rel (%p296) target = $region52
        $region51: #{tpu_custom_call.1} parent=39 // pred_region
          %299 = dma.done [#allocation6], 16384
        $region52: #{tpu_custom_call.1} parent=39 // pred_fallthru
          _
        %s300 = sand.u32 %s50, 1
        %s301 = scalar_lea.sflag [#allocation3], %s300
        %s302 = sand.u32 %s50, 1
        %s303 = smul.addr %s302, 32
        %s304 = scalar_lea.vmem [#allocation2], %s303
        %p305 = pneg %p63
        %p306 = pneg %p60
        %p307 = pneg %p84
        %p308 = pneg %p81
        %p309 = pneg %p105
        %p310 = pneg %p102
        %p311 = pneg %p126
        %p312 = pneg %p123
        %p313 = pneg %p147
        %p314 = pneg %p144
        %p315 = pneg %p175
        %p316 = pneg %p172
        %s317 = sand.u32 %s162, 1
        %s318 = scalar_lea.sflag [#allocation4], %s317
        %s319 = sand.u32 %s162, 1
        %s320 = smul.addr %s319, 32
        %s321 = scalar_lea.vmem [#allocation8], %s320
        %p322 = pneg %p203
        %p323 = pneg %p200
        %s324 = sand.u32 %s190, 1
        %s325 = scalar_lea.sflag [#allocation10], %s324
        %s326 = sand.u32 %s190, 1
        %s327 = smul.addr %s326, 32
        %s328 = scalar_lea.vmem [#allocation9], %s327
        %s329 = smul.u32 2, %s33
        %s330 = smul.u32 2, %s33
        %s331 = smul.u32 2, %s33
        %v332 = vld [vmem:[%s287] sm:$0xff]
        %v333 = vld [vmem:[%s287 + $0x8] sm:$0xff]
        %v334 = vld [vmem:[%s287 + $0x10] sm:$0xff]
        %v335 = vld [vmem:[%s287 + $0x18] sm:$0xff]
        %v336 = vld [vmem:[%s1] sm:$0x3]
        %v337 = vld [vmem:[#allocation5] sm:$0x3]
        %v338 = vadd.f32 %v332, %v333
        %339 = vadd.xlane.f32.xlu0 %v338
        %v340 = vpop.xlane.xlu0 %339
        %v341 = vadd.f32 %v334, %v335
        %342 = vadd.xlane.f32.xlu0 %v341
        %v343 = vpop.xlane.xlu0 %342
        %v344 = vrcp.pop 256.0
        %v345 = vmul.f32 %v340, %v344
        %v346 = vmul.f32 %v343, %v344
        %v347 = vmul.f32 %v332, %v332
        %v348 = vmul.f32 %v333, %v333
        %v349 = vmul.f32 %v334, %v334
        %v350 = vmul.f32 %v335, %v335
        %v351 = vadd.f32 %v347, %v348
        %352 = vadd.xlane.f32.xlu0 %v351
        %v353 = vpop.xlane.xlu0 %352
        %v354 = vadd.f32 %v349, %v350
        %355 = vadd.xlane.f32.xlu0 %v354
        %v356 = vpop.xlane.xlu0 %355
        %v357 = vmul.f32 %v353, %v344
        %v358 = vmul.f32 %v356, %v344
        %v359 = vmul.f32 %v345, %v345
        %v360 = vmul.f32 %v346, %v346
        %v361 = vsub.f32 %v357, %v359
        %v362 = vsub.f32 %v358, %v360
        %v363 = vsub.f32 %v332, %v345
        %v364 = vsub.f32 %v333, %v345
        %v365 = vsub.f32 %v334, %v346
        %v366 = vsub.f32 %v335, %v346
        %v367 = vadd.f32 %v361, 1e-05
        %v368 = vadd.f32 %v362, 1e-05
        %v369 = vrsqrt.pop %v367
        %v370 = vrsqrt.pop %v368
        %v371 = vmul.f32 %v363, %v369
        %v372 = vmul.f32 %v364, %v369
        %v373 = vmul.f32 %v365, %v370
        %v374 = vmul.f32 %v366, %v370
        %v376 = vlaneseq
        %v377 = vshrl.u32 %v376, 7
        %v378 = vsub.s32 0, %v377
        %v379 = vrot.slane %v336, %v378
        %v380 = vlaneseq
        %v381 = vshrl.u32 %v380, 7
        %v382 = vsub.s32 1, %v381
        %v383 = vrot.slane %v336, %v382
        %v386 = vmul.f32 %v371, %v379
        %v387 = vmul.f32 %v372, %v383
        %v388 = vmul.f32 %v373, %v379
        %v389 = vmul.f32 %v374, %v383
        %v391 = vlaneseq
        %v392 = vshrl.u32 %v391, 7
        %v393 = vsub.s32 0, %v392
        %v394 = vrot.slane %v337, %v393
        %v395 = vlaneseq
        %v396 = vshrl.u32 %v395, 7
        %v397 = vsub.s32 1, %v396
        %v398 = vrot.slane %v337, %v397
        %v401 = vadd.f32 %v386, %v394
        %v402 = vadd.f32 %v387, %v398
        %v403 = vadd.f32 %v388, %v394
        %v404 = vadd.f32 %v389, %v398
        %v405 = vld [vmem:[#allocation7] sm:$0xff]
        %v406 = vld [vmem:[#allocation7 + $0x8] sm:$0xff]
        %v407 = vld [vmem:[#allocation7 + $0x10] sm:$0xff]
        %v408 = vld [vmem:[#allocation7 + $0x18] sm:$0xff]
        %v409 = vld [vmem:[#allocation7 + $0x20] sm:$0xff]
        %v410 = vld [vmem:[#allocation7 + $0x28] sm:$0xff]
        %v411 = vld [vmem:[#allocation7 + $0x30] sm:$0xff]
        %v412 = vld [vmem:[#allocation7 + $0x38] sm:$0xff]
        %v413 = vld [vmem:[#allocation7 + $0x40] sm:$0xff]
        %v414 = vld [vmem:[#allocation7 + $0x48] sm:$0xff]
        %v415 = vld [vmem:[#allocation7 + $0x50] sm:$0xff]
        %v416 = vld [vmem:[#allocation7 + $0x58] sm:$0xff]
        %v417 = vld [vmem:[#allocation7 + $0x60] sm:$0xff]
        %v418 = vld [vmem:[#allocation7 + $0x68] sm:$0xff]
        %v419 = vld [vmem:[#allocation7 + $0x70] sm:$0xff]
        %v420 = vld [vmem:[#allocation7 + $0x78] sm:$0xff]
        %v421 = vld [vmem:[#allocation7 + $0x80] sm:$0xff]
        %v422 = vld [vmem:[#allocation7 + $0x88] sm:$0xff]
        %v423 = vld [vmem:[#allocation7 + $0x90] sm:$0xff]
        %v424 = vld [vmem:[#allocation7 + $0x98] sm:$0xff]
        %v425 = vld [vmem:[#allocation7 + $0xa0] sm:$0xff]
        %v426 = vld [vmem:[#allocation7 + $0xa8] sm:$0xff]
        %v427 = vld [vmem:[#allocation7 + $0xb0] sm:$0xff]
        %v428 = vld [vmem:[#allocation7 + $0xb8] sm:$0xff]
        %v429 = vld [vmem:[#allocation7 + $0xc0] sm:$0xff]
        %v430 = vld [vmem:[#allocation7 + $0xc8] sm:$0xff]
        %v431 = vld [vmem:[#allocation7 + $0xd0] sm:$0xff]
        %v432 = vld [vmem:[#allocation7 + $0xd8] sm:$0xff]
        %v433 = vld [vmem:[#allocation7 + $0xe0] sm:$0xff]
        %v434 = vld [vmem:[#allocation7 + $0xe8] sm:$0xff]
        %v435 = vld [vmem:[#allocation7 + $0xf0] sm:$0xff]
        %v436 = vld [vmem:[#allocation7 + $0xf8] sm:$0xff]
        %v437 = vld [vmem:[#allocation7 + $0x100] sm:$0xff]
        %v438 = vld [vmem:[#allocation7 + $0x108] sm:$0xff]
        %v439 = vld [vmem:[#allocation7 + $0x110] sm:$0xff]
        %v440 = vld [vmem:[#allocation7 + $0x118] sm:$0xff]
        %v441 = vld [vmem:[#allocation7 + $0x120] sm:$0xff]
        %v442 = vld [vmem:[#allocation7 + $0x128] sm:$0xff]
        %v443 = vld [vmem:[#allocation7 + $0x130] sm:$0xff]
        %v444 = vld [vmem:[#allocation7 + $0x138] sm:$0xff]
        %v445 = vld [vmem:[#allocation7 + $0x140] sm:$0xff]
        %v446 = vld [vmem:[#allocation7 + $0x148] sm:$0xff]
        %v447 = vld [vmem:[#allocation7 + $0x150] sm:$0xff]
        %v448 = vld [vmem:[#allocation7 + $0x158] sm:$0xff]
        %v449 = vld [vmem:[#allocation7 + $0x160] sm:$0xff]
        %v450 = vld [vmem:[#allocation7 + $0x168] sm:$0xff]
        %v451 = vld [vmem:[#allocation7 + $0x170] sm:$0xff]
        %v452 = vld [vmem:[#allocation7 + $0x178] sm:$0xff]
        %v453 = vld [vmem:[#allocation7 + $0x180] sm:$0xff]
        %v454 = vld [vmem:[#allocation7 + $0x188] sm:$0xff]
        %v455 = vld [vmem:[#allocation7 + $0x190] sm:$0xff]
        %v456 = vld [vmem:[#allocation7 + $0x198] sm:$0xff]
        %v457 = vld [vmem:[#allocation7 + $0x1a0] sm:$0xff]
        %v458 = vld [vmem:[#allocation7 + $0x1a8] sm:$0xff]
        %v459 = vld [vmem:[#allocation7 + $0x1b0] sm:$0xff]
        %v460 = vld [vmem:[#allocation7 + $0x1b8] sm:$0xff]
        %v461 = vld [vmem:[#allocation7 + $0x1c0] sm:$0xff]
        %v462 = vld [vmem:[#allocation7 + $0x1c8] sm:$0xff]
        %v463 = vld [vmem:[#allocation7 + $0x1d0] sm:$0xff]
        %v464 = vld [vmem:[#allocation7 + $0x1d8] sm:$0xff]
        %v465 = vld [vmem:[#allocation7 + $0x1e0] sm:$0xff]
        %v466 = vld [vmem:[#allocation7 + $0x1e8] sm:$0xff]
        %v467 = vld [vmem:[#allocation7 + $0x1f0] sm:$0xff]
        %v468 = vld [vmem:[#allocation7 + $0x1f8] sm:$0xff]
        %v469 = vld [vmem:[#allocation7 + $0x200] sm:$0xff]
        %v470 = vld [vmem:[#allocation7 + $0x208] sm:$0xff]
        %v471 = vld [vmem:[#allocation7 + $0x210] sm:$0xff]
        %v472 = vld [vmem:[#allocation7 + $0x218] sm:$0xff]
        %v473 = vld [vmem:[#allocation7 + $0x220] sm:$0xff]
        %v474 = vld [vmem:[#allocation7 + $0x228] sm:$0xff]
        %v475 = vld [vmem:[#allocation7 + $0x230] sm:$0xff]
        %v476 = vld [vmem:[#allocation7 + $0x238] sm:$0xff]
        %v477 = vld [vmem:[#allocation7 + $0x240] sm:$0xff]
        %v478 = vld [vmem:[#allocation7 + $0x248] sm:$0xff]
        %v479 = vld [vmem:[#allocation7 + $0x250] sm:$0xff]
        %v480 = vld [vmem:[#allocation7 + $0x258] sm:$0xff]
        %v481 = vld [vmem:[#allocation7 + $0x260] sm:$0xff]
        %v482 = vld [vmem:[#allocation7 + $0x268] sm:$0xff]
        %v483 = vld [vmem:[#allocation7 + $0x270] sm:$0xff]
        %v484 = vld [vmem:[#allocation7 + $0x278] sm:$0xff]
        %v485 = vld [vmem:[#allocation7 + $0x280] sm:$0xff]
        %v486 = vld [vmem:[#allocation7 + $0x288] sm:$0xff]
        %v487 = vld [vmem:[#allocation7 + $0x290] sm:$0xff]
        %v488 = vld [vmem:[#allocation7 + $0x298] sm:$0xff]
        %v489 = vld [vmem:[#allocation7 + $0x2a0] sm:$0xff]
        %v490 = vld [vmem:[#allocation7 + $0x2a8] sm:$0xff]
        %v491 = vld [vmem:[#allocation7 + $0x2b0] sm:$0xff]
        %v492 = vld [vmem:[#allocation7 + $0x2b8] sm:$0xff]
        %v493 = vld [vmem:[#allocation7 + $0x2c0] sm:$0xff]
        %v494 = vld [vmem:[#allocation7 + $0x2c8] sm:$0xff]
        %v495 = vld [vmem:[#allocation7 + $0x2d0] sm:$0xff]
        %v496 = vld [vmem:[#allocation7 + $0x2d8] sm:$0xff]
        %v497 = vld [vmem:[#allocation7 + $0x2e0] sm:$0xff]
        %v498 = vld [vmem:[#allocation7 + $0x2e8] sm:$0xff]
        %v499 = vld [vmem:[#allocation7 + $0x2f0] sm:$0xff]
        %v500 = vld [vmem:[#allocation7 + $0x2f8] sm:$0xff]
        %v501 = vld [vmem:[#allocation7 + $0x300] sm:$0xff]
        %v502 = vld [vmem:[#allocation7 + $0x308] sm:$0xff]
        %v503 = vld [vmem:[#allocation7 + $0x310] sm:$0xff]
        %v504 = vld [vmem:[#allocation7 + $0x318] sm:$0xff]
        %v505 = vld [vmem:[#allocation7 + $0x320] sm:$0xff]
        %v506 = vld [vmem:[#allocation7 + $0x328] sm:$0xff]
        %v507 = vld [vmem:[#allocation7 + $0x330] sm:$0xff]
        %v508 = vld [vmem:[#allocation7 + $0x338] sm:$0xff]
        %v509 = vld [vmem:[#allocation7 + $0x340] sm:$0xff]
        %v510 = vld [vmem:[#allocation7 + $0x348] sm:$0xff]
        %v511 = vld [vmem:[#allocation7 + $0x350] sm:$0xff]
        %v512 = vld [vmem:[#allocation7 + $0x358] sm:$0xff]
        %v513 = vld [vmem:[#allocation7 + $0x360] sm:$0xff]
        %v514 = vld [vmem:[#allocation7 + $0x368] sm:$0xff]
        %v515 = vld [vmem:[#allocation7 + $0x370] sm:$0xff]
        %v516 = vld [vmem:[#allocation7 + $0x378] sm:$0xff]
        %v517 = vld [vmem:[#allocation7 + $0x380] sm:$0xff]
        %v518 = vld [vmem:[#allocation7 + $0x388] sm:$0xff]
        %v519 = vld [vmem:[#allocation7 + $0x390] sm:$0xff]
        %v520 = vld [vmem:[#allocation7 + $0x398] sm:$0xff]
        %v521 = vld [vmem:[#allocation7 + $0x3a0] sm:$0xff]
        %v522 = vld [vmem:[#allocation7 + $0x3a8] sm:$0xff]
        %v523 = vld [vmem:[#allocation7 + $0x3b0] sm:$0xff]
        %v524 = vld [vmem:[#allocation7 + $0x3b8] sm:$0xff]
        %v525 = vld [vmem:[#allocation7 + $0x3c0] sm:$0xff]
        %v526 = vld [vmem:[#allocation7 + $0x3c8] sm:$0xff]
        %v527 = vld [vmem:[#allocation7 + $0x3d0] sm:$0xff]
        %v528 = vld [vmem:[#allocation7 + $0x3d8] sm:$0xff]
        %v529 = vld [vmem:[#allocation7 + $0x3e0] sm:$0xff]
        %v530 = vld [vmem:[#allocation7 + $0x3e8] sm:$0xff]
        %v531 = vld [vmem:[#allocation7 + $0x3f0] sm:$0xff]
        %v532 = vld [vmem:[#allocation7 + $0x3f8] sm:$0xff]
        %v533 = vld [vmem:[%s4] sm:$0xf]
        %v535 = vlaneseq
        %v536 = vshrl.u32 %v535, 7
        %v537 = vsub.s32 0, %v536
        %v538 = vrot.slane %v533, %v537
        %v539 = vlaneseq
        %v540 = vshrl.u32 %v539, 7
        %v541 = vsub.s32 1, %v540
        %v542 = vrot.slane %v533, %v541
        %v543 = vlaneseq
        %v544 = vshrl.u32 %v543, 7
        %v545 = vsub.s32 2, %v544
        %v546 = vrot.slane %v533, %v545
        %v547 = vlaneseq
        %v548 = vshrl.u32 %v547, 7
        %v549 = vsub.s32 3, %v548
        %v550 = vrot.slane %v533, %v549
        %555 = vmatprep.subr.mxu0 %v406
        %556 = vmatpush1.msra.mxu0 %v405
        %557 = vmatprep.subr.mxu0 %v410
        %558 = vmatpush1.msra.mxu0 %v409
        %559 = vmatprep.subr.mxu0 %v414
        %560 = vmatpush1.msra.mxu0 %v413
        %561 = vmatprep.subr.mxu0 %v418
        %562 = vmatpush1.msra.mxu0 %v417
        %563 = vmatprep.subr.mxu0 %v422
        %564 = vmatpush1.msra.mxu0 %v421
        %565 = vmatprep.subr.mxu0 %v426
        %566 = vmatpush1.msra.mxu0 %v425
        %567 = vmatprep.subr.mxu0 %v430
        %568 = vmatpush1.msra.mxu0 %v429
        %569 = vmatprep.subr.mxu0 %v434
        %570 = vmatpush1.msra.mxu0 %v433
        %571 = vmatprep.subr.mxu0 %v438
        %572 = vmatpush1.msra.mxu0 %v437
        %573 = vmatprep.subr.mxu0 %v442
        %574 = vmatpush1.msra.mxu0 %v441
        %575 = vmatprep.subr.mxu0 %v446
        %576 = vmatpush1.msra.mxu0 %v445
        %577 = vmatprep.subr.mxu0 %v450
        %578 = vmatpush1.msra.mxu0 %v449
        %579 = vmatprep.subr.mxu0 %v454
        %580 = vmatpush1.msra.mxu0 %v453
        %581 = vmatprep.subr.mxu0 %v458
        %582 = vmatpush1.msra.mxu0 %v457
        %583 = vmatprep.subr.mxu0 %v462
        %584 = vmatpush1.msra.mxu0 %v461
        %585 = vmatprep.subr.mxu0 %v466
        %586 = vmatpush1.msra.mxu0 %v465
        %587 = vmatprep.subr.mxu0 %v470
        %588 = vmatpush1.msra.mxu0 %v469
        %589 = vmatprep.subr.mxu0 %v474
        %590 = vmatpush1.msra.mxu0 %v473
        %591 = vmatprep.subr.mxu0 %v478
        %592 = vmatpush1.msra.mxu0 %v477
        %593 = vmatprep.subr.mxu0 %v482
        %594 = vmatpush1.msra.mxu0 %v481
        %595 = vmatprep.subr.mxu0 %v486
        %596 = vmatpush1.msra.mxu0 %v485
        %597 = vmatprep.subr.mxu0 %v490
        %598 = vmatpush1.msra.mxu0 %v489
        %599 = vmatprep.subr.mxu0 %v494
        %600 = vmatpush1.msra.mxu0 %v493
        %601 = vmatprep.subr.mxu0 %v498
        %602 = vmatpush1.msra.mxu0 %v497
        %603 = vmatprep.subr.mxu0 %v502
        %604 = vmatpush1.msra.mxu0 %v501
        %605 = vmatprep.subr.mxu0 %v506
        %606 = vmatpush1.msra.mxu0 %v505
        %607 = vmatprep.subr.mxu0 %v510
        %608 = vmatpush1.msra.mxu0 %v509
        %609 = vmatprep.subr.mxu0 %v514
        %610 = vmatpush1.msra.mxu0 %v513
        %611 = vmatprep.subr.mxu0 %v518
        %612 = vmatpush1.msra.mxu0 %v517
        %613 = vmatprep.subr.mxu0 %v522
        %614 = vmatpush1.msra.mxu0 %v521
        %615 = vmatprep.subr.mxu0 %v526
        %616 = vmatpush1.msra.mxu0 %v525
        %617 = vmatprep.subr.mxu0 %v530
        %618 = vmatpush1.msra.mxu0 %v529
        %619 = vmatprep.mubr.f32.mxu0 %v402
        %620 = vmatmul.mubr.f32.gmra.mrb[0].mxu0 %v401
        %v621 = vpop.f32.mrb[0].mxu0
        %v622 = vadd.f32 %v538, %v621
        %v623 = vpop.f32.mrb[0].mxu0
        %v624 = vadd.f32 %v542, %v623
        %625 = vmatprep.mubr.f32.mxu0 %v404
        %626 = vmatmul.mubr.f32.gmra.mrb[0].mxu0 %v403
        %v627 = vpop.f32.mrb[0].mxu0
        %v628 = vadd.f32 %v538, %v627
        %v629 = vpop.f32.mrb[0].mxu0
        %v630 = vadd.f32 %v542, %v629
        %631 = vdwg.mxu0
        %632 = vmatprep.subr.mxu0 %v408
        %633 = vmatpush1.msra.mxu0 %v407
        %634 = vmatprep.subr.mxu0 %v412
        %635 = vmatpush1.msra.mxu0 %v411
        %636 = vmatprep.subr.mxu0 %v416
        %637 = vmatpush1.msra.mxu0 %v415
        %638 = vmatprep.subr.mxu0 %v420
        %639 = vmatpush1.msra.mxu0 %v419
        %640 = vmatprep.subr.mxu0 %v424
        %641 = vmatpush1.msra.mxu0 %v423
        %642 = vmatprep.subr.mxu0 %v428
        %643 = vmatpush1.msra.mxu0 %v427
        %644 = vmatprep.subr.mxu0 %v432
        %645 = vmatpush1.msra.mxu0 %v431
        %646 = vmatprep.subr.mxu0 %v436
        %647 = vmatpush1.msra.mxu0 %v435
        %648 = vmatprep.subr.mxu0 %v440
        %649 = vmatpush1.msra.mxu0 %v439
        %650 = vmatprep.subr.mxu0 %v444
        %651 = vmatpush1.msra.mxu0 %v443
        %652 = vmatprep.subr.mxu0 %v448
        %653 = vmatpush1.msra.mxu0 %v447
        %654 = vmatprep.subr.mxu0 %v452
        %655 = vmatpush1.msra.mxu0 %v451
        %656 = vmatprep.subr.mxu0 %v456
        %657 = vmatpush1.msra.mxu0 %v455
        %658 = vmatprep.subr.mxu0 %v460
        %659 = vmatpush1.msra.mxu0 %v459
        %660 = vmatprep.subr.mxu0 %v464
        %661 = vmatpush1.msra.mxu0 %v463
        %662 = vmatprep.subr.mxu0 %v468
        %663 = vmatpush1.msra.mxu0 %v467
        %664 = vmatprep.subr.mxu0 %v472
        %665 = vmatpush1.msra.mxu0 %v471
        %666 = vmatprep.subr.mxu0 %v476
        %667 = vmatpush1.msra.mxu0 %v475
        %668 = vmatprep.subr.mxu0 %v480
        %669 = vmatpush1.msra.mxu0 %v479
        %670 = vmatprep.subr.mxu0 %v484
        %671 = vmatpush1.msra.mxu0 %v483
        %672 = vmatprep.subr.mxu0 %v488
        %673 = vmatpush1.msra.mxu0 %v487
        %674 = vmatprep.subr.mxu0 %v492
        %675 = vmatpush1.msra.mxu0 %v491
        %676 = vmatprep.subr.mxu0 %v496
        %677 = vmatpush1.msra.mxu0 %v495
        %678 = vmatprep.subr.mxu0 %v500
        %679 = vmatpush1.msra.mxu0 %v499
        %680 = vmatprep.subr.mxu0 %v504
        %681 = vmatpush1.msra.mxu0 %v503
        %682 = vmatprep.subr.mxu0 %v508
        %683 = vmatpush1.msra.mxu0 %v507
        %684 = vmatprep.subr.mxu0 %v512
        %685 = vmatpush1.msra.mxu0 %v511
        %686 = vmatprep.subr.mxu0 %v516
        %687 = vmatpush1.msra.mxu0 %v515
        %688 = vmatprep.subr.mxu0 %v520
        %689 = vmatpush1.msra.mxu0 %v519
        %690 = vmatprep.subr.mxu0 %v524
        %691 = vmatpush1.msra.mxu0 %v523
        %692 = vmatprep.subr.mxu0 %v528
        %693 = vmatpush1.msra.mxu0 %v527
        %694 = vmatprep.subr.mxu0 %v532
        %695 = vmatpush1.msra.mxu0 %v531
        %696 = vmatprep.mubr.f32.mxu0 %v402
        %697 = vmatmul.mubr.f32.gmra.mrb[0].mxu0 %v401
        %v698 = vpop.f32.mrb[0].mxu0
        %v699 = vadd.f32 %v546, %v698
        %v700 = vpop.f32.mrb[0].mxu0
        %v701 = vadd.f32 %v550, %v700
        %702 = vmatprep.mubr.f32.mxu0 %v404
        %703 = vmatmul.mubr.f32.gmra.mrb[0].mxu0 %v403
        %v704 = vpop.f32.mrb[0].mxu0
        %v705 = vadd.f32 %v546, %v704
        %v706 = vpop.f32.mrb[0].mxu0
        %v707 = vadd.f32 %v550, %v706
        %708 = vdwg.mxu0
        %v709 = vcombine.high %v622, 0.0
        %v711 = vunpack.c.l.s4 1983009808
        %v712 = vunpack.c.0.s8 %v711
        %v713 = vlaneseq
        %v714 = vshrl.u32 %v713, 7
        %v715 = vsub.s32 %v712, %v714
        %v716 = vrot.slane %v622, %v715
        %v718 = vunpack.c.l.s4 1983009808
        %v719 = vunpack.c.0.s8 %v718
        %v720 = vlaneseq
        %v721 = vshrl.u32 %v720, 7
        %v722 = vsub.s32 %v719, %v721
        %v723 = vrot.slane %v709, %v722
        %v724 = vcombine.high %v624, 0.0
        %v726 = vunpack.c.l.s4 1983009808
        %v727 = vunpack.c.0.s8 %v726
        %v728 = vlaneseq
        %v729 = vshrl.u32 %v728, 7
        %v730 = vsub.s32 %v727, %v729
        %v731 = vrot.slane %v624, %v730
        %v733 = vunpack.c.l.s4 1983009808
        %v734 = vunpack.c.0.s8 %v733
        %v735 = vlaneseq
        %v736 = vshrl.u32 %v735, 7
        %v737 = vsub.s32 %v734, %v736
        %v738 = vrot.slane %v724, %v737
        %v739 = vcombine.low %v716, %v731
        %v740 = vcombine.high %v716, %v731
        %v742 = vunpack.c.l.s4 1934713408
        %v743 = vunpack.c.0.s8 %v742
        %v744 = vlaneseq
        %v745 = vshrl.u32 %v744, 7
        %v746 = vsub.s32 %v743, %v745
        %v747 = vrot.slane %v739, %v746
        %v749 = vunpack.c.l.s4 1934713408
        %v750 = vunpack.c.0.s8 %v749
        %v751 = vlaneseq
        %v752 = vshrl.u32 %v751, 7
        %v753 = vsub.s32 %v750, %v752
        %v754 = vrot.slane %v740, %v753
        %v755 = vcombine.low %v723, %v738
        %v756 = vcombine.high %v723, %v738
        %v758 = vunpack.c.l.s4 1934713408
        %v759 = vunpack.c.0.s8 %v758
        %v760 = vlaneseq
        %v761 = vshrl.u32 %v760, 7
        %v762 = vsub.s32 %v759, %v761
        %v763 = vrot.slane %v755, %v762
        %v765 = vunpack.c.l.s4 1934713408
        %v766 = vunpack.c.0.s8 %v765
        %v767 = vlaneseq
        %v768 = vshrl.u32 %v767, 7
        %v769 = vsub.s32 %v766, %v768
        %v770 = vrot.slane %v756, %v769
        %v771 = vcombine.high %v747, 0.0
        %v772 = vcombine.high %v754, 0.0
        %v773 = vcombine.high %v763, 0.0
        %v774 = vcombine.high %v770, 0.0
        %v775 = vcombine.high %v628, 0.0
        %v777 = vunpack.c.l.s4 1983009808
        %v778 = vunpack.c.0.s8 %v777
        %v779 = vlaneseq
        %v780 = vshrl.u32 %v779, 7
        %v781 = vsub.s32 %v778, %v780
        %v782 = vrot.slane %v628, %v781
        %v784 = vunpack.c.l.s4 1983009808
        %v785 = vunpack.c.0.s8 %v784
        %v786 = vlaneseq
        %v787 = vshrl.u32 %v786, 7
        %v788 = vsub.s32 %v785, %v787
        %v789 = vrot.slane %v775, %v788
        %v790 = vcombine.high %v630, 0.0
        %v792 = vunpack.c.l.s4 1983009808
        %v793 = vunpack.c.0.s8 %v792
        %v794 = vlaneseq
        %v795 = vshrl.u32 %v794, 7
        %v796 = vsub.s32 %v793, %v795
        %v797 = vrot.slane %v630, %v796
        %v799 = vunpack.c.l.s4 1983009808
        %v800 = vunpack.c.0.s8 %v799
        %v801 = vlaneseq
        %v802 = vshrl.u32 %v801, 7
        %v803 = vsub.s32 %v800, %v802
        %v804 = vrot.slane %v790, %v803
        %v805 = vcombine.low %v782, %v797
        %v806 = vcombine.high %v782, %v797
        %v808 = vunpack.c.l.s4 1934713408
        %v809 = vunpack.c.0.s8 %v808
        %v810 = vlaneseq
        %v811 = vshrl.u32 %v810, 7
        %v812 = vsub.s32 %v809, %v811
        %v813 = vrot.slane %v805, %v812
        %v815 = vunpack.c.l.s4 1934713408
        %v816 = vunpack.c.0.s8 %v815
        %v817 = vlaneseq
        %v818 = vshrl.u32 %v817, 7
        %v819 = vsub.s32 %v816, %v818
        %v820 = vrot.slane %v806, %v819
        %v821 = vcombine.low %v789, %v804
        %v822 = vcombine.high %v789, %v804
        %v824 = vunpack.c.l.s4 1934713408
        %v825 = vunpack.c.0.s8 %v824
        %v826 = vlaneseq
        %v827 = vshrl.u32 %v826, 7
        %v828 = vsub.s32 %v825, %v827
        %v829 = vrot.slane %v821, %v828
        %v831 = vunpack.c.l.s4 1934713408
        %v832 = vunpack.c.0.s8 %v831
        %v833 = vlaneseq
        %v834 = vshrl.u32 %v833, 7
        %v835 = vsub.s32 %v832, %v834
        %v836 = vrot.slane %v822, %v835
        %v837 = vcombine.high %v813, 0.0
        %v838 = vcombine.high %v820, 0.0
        %v839 = vcombine.high %v829, 0.0
        %v840 = vcombine.high %v836, 0.0
        %v841 = vcombine.low %v747, %v754
        %v843 = vunpack.c.l.s4 1983009808
        %v844 = vunpack.c.0.s8 %v843
        %v845 = vlaneseq
        %v846 = vshrl.u32 %v845, 7
        %v847 = vsub.s32 %v844, %v846
        %v848 = vrot.slane %v841, %v847
        %v849 = vcombine.low %v771, %v772
        %v851 = vunpack.c.l.s4 1983009808
        %v852 = vunpack.c.0.s8 %v851
        %v853 = vlaneseq
        %v854 = vshrl.u32 %v853, 7
        %v855 = vsub.s32 %v852, %v854
        %v856 = vrot.slane %v849, %v855
        %v857 = vcombine.low %v763, %v770
        %v859 = vunpack.c.l.s4 1983009808
        %v860 = vunpack.c.0.s8 %v859
        %v861 = vlaneseq
        %v862 = vshrl.u32 %v861, 7
        %v863 = vsub.s32 %v860, %v862
        %v864 = vrot.slane %v857, %v863
        %v865 = vcombine.low %v773, %v774
        %v867 = vunpack.c.l.s4 1983009808
        %v868 = vunpack.c.0.s8 %v867
        %v869 = vlaneseq
        %v870 = vshrl.u32 %v869, 7
        %v871 = vsub.s32 %v868, %v870
        %v872 = vrot.slane %v865, %v871
        %v873 = vcombine.low %v848, %v856
        %v875 = vunpack.c.l.s4 1934713408
        %v876 = vunpack.c.0.s8 %v875
        %v877 = vlaneseq
        %v878 = vshrl.u32 %v877, 7
        %v879 = vsub.s32 %v876, %v878
        %v880 = vrot.slane %v873, %v879
        %v881 = vcombine.low %v864, %v872
        %v883 = vunpack.c.l.s4 1934713408
        %v884 = vunpack.c.0.s8 %v883
        %v885 = vlaneseq
        %v886 = vshrl.u32 %v885, 7
        %v887 = vsub.s32 %v884, %v886
        %v888 = vrot.slane %v881, %v887
        %v889 = vcombine.low %v880, %v888
        %v890 = vcombine.high %v880, %v888
        %v891 = vcombine.low %v813, %v820
        %v893 = vunpack.c.l.s4 1983009808
        %v894 = vunpack.c.0.s8 %v893
        %v895 = vlaneseq
        %v896 = vshrl.u32 %v895, 7
        %v897 = vsub.s32 %v894, %v896
        %v898 = vrot.slane %v891, %v897
        %v899 = vcombine.low %v837, %v838
        %v901 = vunpack.c.l.s4 1983009808
        %v902 = vunpack.c.0.s8 %v901
        %v903 = vlaneseq
        %v904 = vshrl.u32 %v903, 7
        %v905 = vsub.s32 %v902, %v904
        %v906 = vrot.slane %v899, %v905
        %v907 = vcombine.low %v829, %v836
        %v909 = vunpack.c.l.s4 1983009808
        %v910 = vunpack.c.0.s8 %v909
        %v911 = vlaneseq
        %v912 = vshrl.u32 %v911, 7
        %v913 = vsub.s32 %v910, %v912
        %v914 = vrot.slane %v907, %v913
        %v915 = vcombine.low %v839, %v840
        %v917 = vunpack.c.l.s4 1983009808
        %v918 = vunpack.c.0.s8 %v917
        %v919 = vlaneseq
        %v920 = vshrl.u32 %v919, 7
        %v921 = vsub.s32 %v918, %v920
        %v922 = vrot.slane %v915, %v921
        %v923 = vcombine.low %v898, %v906
        %v925 = vunpack.c.l.s4 1934713408
        %v926 = vunpack.c.0.s8 %v925
        %v927 = vlaneseq
        %v928 = vshrl.u32 %v927, 7
        %v929 = vsub.s32 %v926, %v928
        %v930 = vrot.slane %v923, %v929
        %v931 = vcombine.low %v914, %v922
        %v933 = vunpack.c.l.s4 1934713408
        %v934 = vunpack.c.0.s8 %v933
        %v935 = vlaneseq
        %v936 = vshrl.u32 %v935, 7
        %v937 = vsub.s32 %v934, %v936
        %v938 = vrot.slane %v931, %v937
        %v939 = vcombine.low %v930, %v938
        %v940 = vcombine.high %v930, %v938
        %v941 = vcombine.high %v699, 0.0
        %v943 = vunpack.c.l.s4 1983009808
        %v944 = vunpack.c.0.s8 %v943
        %v945 = vlaneseq
        %v946 = vshrl.u32 %v945, 7
        %v947 = vsub.s32 %v944, %v946
        %v948 = vrot.slane %v699, %v947
        %v950 = vunpack.c.l.s4 1983009808
        %v951 = vunpack.c.0.s8 %v950
        %v952 = vlaneseq
        %v953 = vshrl.u32 %v952, 7
        %v954 = vsub.s32 %v951, %v953
        %v955 = vrot.slane %v941, %v954
        %v956 = vcombine.high %v701, 0.0
        %v958 = vunpack.c.l.s4 1983009808
        %v959 = vunpack.c.0.s8 %v958
        %v960 = vlaneseq
        %v961 = vshrl.u32 %v960, 7
        %v962 = vsub.s32 %v959, %v961
        %v963 = vrot.slane %v701, %v962
        %v965 = vunpack.c.l.s4 1983009808
        %v966 = vunpack.c.0.s8 %v965
        %v967 = vlaneseq
        %v968 = vshrl.u32 %v967, 7
        %v969 = vsub.s32 %v966, %v968
        %v970 = vrot.slane %v956, %v969
        %v971 = vcombine.low %v948, %v963
        %v972 = vcombine.high %v948, %v963
        %v974 = vunpack.c.l.s4 1934713408
        %v975 = vunpack.c.0.s8 %v974
        %v976 = vlaneseq
        %v977 = vshrl.u32 %v976, 7
        %v978 = vsub.s32 %v975, %v977
        %v979 = vrot.slane %v971, %v978
        %v981 = vunpack.c.l.s4 1934713408
        %v982 = vunpack.c.0.s8 %v981
        %v983 = vlaneseq
        %v984 = vshrl.u32 %v983, 7
        %v985 = vsub.s32 %v982, %v984
        %v986 = vrot.slane %v972, %v985
        %v987 = vcombine.low %v955, %v970
        %v988 = vcombine.high %v955, %v970
        %v990 = vunpack.c.l.s4 1934713408
        %v991 = vunpack.c.0.s8 %v990
        %v992 = vlaneseq
        %v993 = vshrl.u32 %v992, 7
        %v994 = vsub.s32 %v991, %v993
        %v995 = vrot.slane %v987, %v994
        %v997 = vunpack.c.l.s4 1934713408
        %v998 = vunpack.c.0.s8 %v997
        %v999 = vlaneseq
        %v1000 = vshrl.u32 %v999, 7
        %v1001 = vsub.s32 %v998, %v1000
        %v1002 = vrot.slane %v988, %v1001
        %v1003 = vcombine.high %v979, 0.0
        %v1004 = vcombine.high %v986, 0.0
        %v1005 = vcombine.high %v995, 0.0
        %v1006 = vcombine.high %v1002, 0.0
        %v1007 = vcombine.high %v705, 0.0
        %v1009 = vunpack.c.l.s4 1983009808
        %v1010 = vunpack.c.0.s8 %v1009
        %v1011 = vlaneseq
        %v1012 = vshrl.u32 %v1011, 7
        %v1013 = vsub.s32 %v1010, %v1012
        %v1014 = vrot.slane %v705, %v1013
        %v1016 = vunpack.c.l.s4 1983009808
        %v1017 = vunpack.c.0.s8 %v1016
        %v1018 = vlaneseq
        %v1019 = vshrl.u32 %v1018, 7
        %v1020 = vsub.s32 %v1017, %v1019
        %v1021 = vrot.slane %v1007, %v1020
        %v1022 = vcombine.high %v707, 0.0
        %v1024 = vunpack.c.l.s4 1983009808
        %v1025 = vunpack.c.0.s8 %v1024
        %v1026 = vlaneseq
        %v1027 = vshrl.u32 %v1026, 7
        %v1028 = vsub.s32 %v1025, %v1027
        %v1029 = vrot.slane %v707, %v1028
        %v1031 = vunpack.c.l.s4 1983009808
        %v1032 = vunpack.c.0.s8 %v1031
        %v1033 = vlaneseq
        %v1034 = vshrl.u32 %v1033, 7
        %v1035 = vsub.s32 %v1032, %v1034
        %v1036 = vrot.slane %v1022, %v1035
        %v1037 = vcombine.low %v1014, %v1029
        %v1038 = vcombine.high %v1014, %v1029
        %v1040 = vunpack.c.l.s4 1934713408
        %v1041 = vunpack.c.0.s8 %v1040
        %v1042 = vlaneseq
        %v1043 = vshrl.u32 %v1042, 7
        %v1044 = vsub.s32 %v1041, %v1043
        %v1045 = vrot.slane %v1037, %v1044
        %v1047 = vunpack.c.l.s4 1934713408
        %v1048 = vunpack.c.0.s8 %v1047
        %v1049 = vlaneseq
        %v1050 = vshrl.u32 %v1049, 7
        %v1051 = vsub.s32 %v1048, %v1050
        %v1052 = vrot.slane %v1038, %v1051
        %v1053 = vcombine.low %v1021, %v1036
        %v1054 = vcombine.high %v1021, %v1036
        %v1056 = vunpack.c.l.s4 1934713408
        %v1057 = vunpack.c.0.s8 %v1056
        %v1058 = vlaneseq
        %v1059 = vshrl.u32 %v1058, 7
        %v1060 = vsub.s32 %v1057, %v1059
        %v1061 = vrot.slane %v1053, %v1060
        %v1063 = vunpack.c.l.s4 1934713408
        %v1064 = vunpack.c.0.s8 %v1063
        %v1065 = vlaneseq
        %v1066 = vshrl.u32 %v1065, 7
        %v1067 = vsub.s32 %v1064, %v1066
        %v1068 = vrot.slane %v1054, %v1067
        %v1069 = vcombine.high %v1045, 0.0
        %v1070 = vcombine.high %v1052, 0.0
        %v1071 = vcombine.high %v1061, 0.0
        %v1072 = vcombine.high %v1068, 0.0
        %v1073 = vcombine.low %v979, %v986
        %v1075 = vunpack.c.l.s4 1983009808
        %v1076 = vunpack.c.0.s8 %v1075
        %v1077 = vlaneseq
        %v1078 = vshrl.u32 %v1077, 7
        %v1079 = vsub.s32 %v1076, %v1078
        %v1080 = vrot.slane %v1073, %v1079
        %v1081 = vcombine.low %v1003, %v1004
        %v1083 = vunpack.c.l.s4 1983009808
        %v1084 = vunpack.c.0.s8 %v1083
        %v1085 = vlaneseq
        %v1086 = vshrl.u32 %v1085, 7
        %v1087 = vsub.s32 %v1084, %v1086
        %v1088 = vrot.slane %v1081, %v1087
        %v1089 = vcombine.low %v995, %v1002
        %v1091 = vunpack.c.l.s4 1983009808
        %v1092 = vunpack.c.0.s8 %v1091
        %v1093 = vlaneseq
        %v1094 = vshrl.u32 %v1093, 7
        %v1095 = vsub.s32 %v1092, %v1094
        %v1096 = vrot.slane %v1089, %v1095
        %v1097 = vcombine.low %v1005, %v1006
        %v1099 = vunpack.c.l.s4 1983009808
        %v1100 = vunpack.c.0.s8 %v1099
        %v1101 = vlaneseq
        %v1102 = vshrl.u32 %v1101, 7
        %v1103 = vsub.s32 %v1100, %v1102
        %v1104 = vrot.slane %v1097, %v1103
        %v1105 = vcombine.low %v1080, %v1088
        %v1107 = vunpack.c.l.s4 1934713408
        %v1108 = vunpack.c.0.s8 %v1107
        %v1109 = vlaneseq
        %v1110 = vshrl.u32 %v1109, 7
        %v1111 = vsub.s32 %v1108, %v1110
        %v1112 = vrot.slane %v1105, %v1111
        %v1113 = vcombine.low %v1096, %v1104
        %v1115 = vunpack.c.l.s4 1934713408
        %v1116 = vunpack.c.0.s8 %v1115
        %v1117 = vlaneseq
        %v1118 = vshrl.u32 %v1117, 7
        %v1119 = vsub.s32 %v1116, %v1118
        %v1120 = vrot.slane %v1113, %v1119
        %v1121 = vcombine.low %v1112, %v1120
        %v1122 = vcombine.high %v1112, %v1120
        %v1123 = vcombine.low %v1045, %v1052
        %v1125 = vunpack.c.l.s4 1983009808
        %v1126 = vunpack.c.0.s8 %v1125
        %v1127 = vlaneseq
        %v1128 = vshrl.u32 %v1127, 7
        %v1129 = vsub.s32 %v1126, %v1128
        %v1130 = vrot.slane %v1123, %v1129
        %v1131 = vcombine.low %v1069, %v1070
        %v1133 = vunpack.c.l.s4 1983009808
        %v1134 = vunpack.c.0.s8 %v1133
        %v1135 = vlaneseq
        %v1136 = vshrl.u32 %v1135, 7
        %v1137 = vsub.s32 %v1134, %v1136
        %v1138 = vrot.slane %v1131, %v1137
        %v1139 = vcombine.low %v1061, %v1068
        %v1141 = vunpack.c.l.s4 1983009808
        %v1142 = vunpack.c.0.s8 %v1141
        %v1143 = vlaneseq
        %v1144 = vshrl.u32 %v1143, 7
        %v1145 = vsub.s32 %v1142, %v1144
        %v1146 = vrot.slane %v1139, %v1145
        %v1147 = vcombine.low %v1071, %v1072
        %v1149 = vunpack.c.l.s4 1983009808
        %v1150 = vunpack.c.0.s8 %v1149
        %v1151 = vlaneseq
        %v1152 = vshrl.u32 %v1151, 7
        %v1153 = vsub.s32 %v1150, %v1152
        %v1154 = vrot.slane %v1147, %v1153
        %v1155 = vcombine.low %v1130, %v1138
        %v1157 = vunpack.c.l.s4 1934713408
        %v1158 = vunpack.c.0.s8 %v1157
        %v1159 = vlaneseq
        %v1160 = vshrl.u32 %v1159, 7
        %v1161 = vsub.s32 %v1158, %v1160
        %v1162 = vrot.slane %v1155, %v1161
        %v1163 = vcombine.low %v1146, %v1154
        %v1165 = vunpack.c.l.s4 1934713408
        %v1166 = vunpack.c.0.s8 %v1165
        %v1167 = vlaneseq
        %v1168 = vshrl.u32 %v1167, 7
        %v1169 = vsub.s32 %v1166, %v1168
        %v1170 = vrot.slane %v1163, %v1169
        %v1171 = vcombine.low %v1162, %v1170
        %v1172 = vcombine.high %v1162, %v1170
        %1173 = vst [vmem:[%s321] sm:$0xff] %v889
        %1174 = vst [vmem:[%s321 + $0x8] sm:$0xff] %v939
        %1175 = vst [vmem:[%s321 + $0x10] sm:$0xff] %v890
        %1176 = vst [vmem:[%s321 + $0x18] sm:$0xff] %v940
        %1177 = vst [vmem:[%s328] sm:$0xff] %v1121
        %1178 = vst [vmem:[%s328 + $0x8] sm:$0xff] %v1171
        %1179 = vst [vmem:[%s328 + $0x10] sm:$0xff] %v1122
        %1180 = vst [vmem:[%s328 + $0x18] sm:$0xff] %v1172
        %s1181 = sand.u32 %s162, 1
        %s1182 = scalar_lea.sflag [#allocation4], %s1181
        %s1183 = sand.u32 %s162, 1
        %s1184 = smul.addr %s1183, 32
        %s1185 = scalar_lea.vmem [#allocation8], %s1184
        %s1186 = sand.u32 %s190, 1
        %s1187 = scalar_lea.sflag [#allocation10], %s1186
        %s1188 = sand.u32 %s190, 1
        %s1189 = smul.addr %s1188, 32
        %s1190 = scalar_lea.vmem [#allocation9], %s1189
        // Predicated region
        $region53: #{tpu_custom_call.1} parent=39 // pred_check
          %p1191 = pneg %p172
        $region54: #{tpu_custom_call.1} parent=39 // pred_check_branch
          %1193 = sbr.rel (%p1191) target = $region56
        $region55: #{tpu_custom_call.1} parent=39 // pred_region
          #allocation12 [shape = 'u32[6]{0}', space=smem, size = 0x18, scoped, tag = 'DMA stride descriptor']
          %s1194 = smul.u32 2, %s33
          %s1196 = ssub.s32 512, 512
          %1197 = vsyncadd %s1182, %s1196
          %s1198 = smul.addr %s32, 8
          %s1199 = sadd.s32 %s1194, %s1198
          %s1200 = smul.addr %s1199, 128
          %s1201 = scalar_lea.hbm %s5, %s1200
          %s1203 = sshll.u32 1, 14
          %s1204 = sxor.u32 4294967295, %s1203
          %s1207 = sshll.u32 7, 18
          %s1208 = sxor.u32 4294967295, %s1207
          %s1209 = sand.u32 0, %s1208
          %s1211 = sor.u32 %s1209, 0
          %s1213 = sshll.u32 3, 24
          %s1214 = sxor.u32 4294967295, %s1213
          %s1215 = sand.u32 %s1211, %s1214
          %s1217 = sor.u32 %s1215, 0
          %s1218 = sshll.u32 %s1185, 4
          %s1219 = int_to_ptr.vmem [resolvable:$true] %s1218
          %1225 = sst [smem:[#allocation12]] 256
          %s1226 = scalar_lea.smem [#allocation12], 1
          %1227 = sst [smem:[%s1226]] 512
          %s1228 = scalar_lea.smem [#allocation12], 2
          %1229 = sst [smem:[%s1228]] 2
          %s1230 = scalar_lea.smem [#allocation12], 3
          %1231 = sst [smem:[%s1230]] 128
          %s1232 = scalar_lea.smem [#allocation12], 4
          %1233 = sst [smem:[%s1232]] 128
          %s1234 = scalar_lea.smem [#allocation12], 5
          %1235 = sst [smem:[%s1234]] 8
          %1237 = dma.general %s1219, 512, %s1201, %s1182, [#allocation11], [#allocation12], %s1217, 0
        $region56: #{tpu_custom_call.1} parent=39 // pred_fallthru
          _
        // Predicated region
        $region57: #{tpu_custom_call.1} parent=39 // pred_check
          %p1238 = pneg %p200
        $region58: #{tpu_custom_call.1} parent=39 // pred_check_branch
          %1240 = sbr.rel (%p1238) target = $region60
        $region59: #{tpu_custom_call.1} parent=39 // pred_region
          #allocation14 [shape = 'u32[6]{0}', space=smem, size = 0x18, scoped, tag = 'DMA stride descriptor']
          %s1241 = smul.u32 2, %s33
          %s1243 = ssub.s32 512, 512
          %1244 = vsyncadd %s1187, %s1243
          %s1245 = smul.addr %s32, 8
          %s1246 = sadd.s32 %s1241, %s1245
          %s1247 = smul.addr %s1246, 128
          %s1248 = scalar_lea.hbm %s6, %s1247
          %s1250 = sshll.u32 1, 14
          %s1251 = sxor.u32 4294967295, %s1250
          %s1254 = sshll.u32 7, 18
          %s1255 = sxor.u32 4294967295, %s1254
          %s1256 = sand.u32 0, %s1255
          %s1258 = sor.u32 %s1256, 0
          %s1260 = sshll.u32 3, 24
          %s1261 = sxor.u32 4294967295, %s1260
          %s1262 = sand.u32 %s1258, %s1261
          %s1264 = sor.u32 %s1262, 0
          %s1265 = sshll.u32 %s1190, 4
          %s1266 = int_to_ptr.vmem [resolvable:$true] %s1265
          %1272 = sst [smem:[#allocation14]] 256
          %s1273 = scalar_lea.smem [#allocation14], 1
          %1274 = sst [smem:[%s1273]] 512
          %s1275 = scalar_lea.smem [#allocation14], 2
          %1276 = sst [smem:[%s1275]] 2
          %s1277 = scalar_lea.smem [#allocation14], 3
          %1278 = sst [smem:[%s1277]] 128
          %s1279 = scalar_lea.smem [#allocation14], 4
          %1280 = sst [smem:[%s1279]] 128
          %s1281 = scalar_lea.smem [#allocation14], 5
          %1282 = sst [smem:[%s1281]] 8
          %1284 = dma.general %s1266, 512, %s1248, %s1187, [#allocation13], [#allocation14], %s1264, 0
        $region60: #{tpu_custom_call.1} parent=39 // pred_fallthru
          _
      $region40: #{tpu_custom_call.1} parent=5 // pred_fallthru
        _
      %p1285 = scmp.le.s32.totalorder 2, %s23
      // Predicated region
      $region61: #{tpu_custom_call.1} parent=5 // pred_check
        %p1286 = pneg %p1285
      $region62: #{tpu_custom_call.1} parent=5 // pred_check_branch
        %1288 = sbr.rel (%p1286) target = $region64
      $region63: #{tpu_custom_call.1} parent=5 // pred_region
        %s1289 = ssub.s32 %s23, 2
        // Predicated region
        $region65: #{tpu_custom_call.1} parent=63 // pred_check
          %p1290 = pneg %p178
        $region66: #{tpu_custom_call.1} parent=63 // pred_check_branch
          %1292 = sbr.rel (%p1290) target = $region68
        $region67: #{tpu_custom_call.1} parent=63 // pred_region
          %s1293 = sand.u32 %s163, 1
          %s1294 = scalar_lea.sflag [#allocation4], %s1293
          %s1295 = sand.u32 %s163, 1
          %s1296 = smul.addr %s1295, 32
          %s1297 = scalar_lea.vmem [#allocation8], %s1296
          %1298 = dma.done %s1294, 512
        $region68: #{tpu_custom_call.1} parent=63 // pred_fallthru
          _
        // Predicated region
        $region69: #{tpu_custom_call.1} parent=63 // pred_check
          %p1299 = pneg %p206
        $region70: #{tpu_custom_call.1} parent=63 // pred_check_branch
          %1301 = sbr.rel (%p1299) target = $region72
        $region71: #{tpu_custom_call.1} parent=63 // pred_region
          %s1302 = sand.u32 %s191, 1
          %s1303 = scalar_lea.sflag [#allocation10], %s1302
          %s1304 = sand.u32 %s191, 1
          %s1305 = smul.addr %s1304, 32
          %s1306 = scalar_lea.vmem [#allocation9], %s1305
          %1307 = dma.done %s1303, 512
        $region72: #{tpu_custom_call.1} parent=63 // pred_fallthru
          _
      $region64: #{tpu_custom_call.1} parent=5 // pred_fallthru
        _
    $region6: #{tpu_custom_call.1} parent=1 // loop_footer
      %s27 = sadd.s32 1, %s23
    $region7: #{tpu_custom_call.1} parent=1 // loop_footer_branch
      %22 = sbr.rel target = $region3
    $region8: #{tpu_custom_call.1} parent=1 // loop_exit
      _
    %1308 = vsyncpa [#allocation3], 1
    %s1309 = scalar_lea.sflag [#allocation3], 1
    %1310 = vsyncpa %s1309, 1
    %1311 = vsyncpa [#allocation6], 1
    %1312 = vsyncpa [#allocation4], 1
    %s1313 = scalar_lea.sflag [#allocation4], 1
    %1314 = vsyncpa %s1313, 1
    %1315 = vsyncpa [#allocation10], 1
    %s1316 = scalar_lea.sflag [#allocation10], 1
    %1317 = vsyncpa %s1316, 1

</llo_original>
